<compile_context>
chip_gen: v6e
topology: v6e:2x2x1
jax: 0.10.0
libtpu: 0.0.40
codegen_flags: <defaults>
</compile_context>

<pallas_src>
import functools

import jax
import jax.numpy as jnp
from jax.experimental import pallas as pl
from jax.experimental.pallas import tpu as pltpu

N_NODES = 8           # nodes per graph
F_IN = 16             # in_features
F_OUT = 32            # out_features
B_GRAPHS = 64         # graphs in the batch
GRAPHS_PER_STEP = 16  # graphs packed per grid step -> GN = 128 (lane-dense attention)
GAT_ALPHA = 0.2       # LeakyReLU negative slope


# ----------------------------- small math helpers -----------------------------
def _leaky_relu(x, alpha):
    return jnp.where(x >= 0, x, alpha * x)


def _elu(x):
    # F.elu with alpha=1; clamp the exp argument so the untaken branch stays finite.
    return jnp.where(x > 0, x, jnp.exp(jnp.minimum(x, 0.0)) - 1.0)


def _log_softmax_rows(x):
    m = jnp.max(x, axis=1, keepdims=True)
    s = x - m
    return s - jnp.log(jnp.sum(jnp.exp(s), axis=1, keepdims=True))


# --------------------------------- the kernel ---------------------------------
def ggat_kernel(h_ref, hT_ref, adj_ref, wcat_ref, wgru_ref, aux_ref,
                cpm_ref, sg_ref, out_ref, *, alpha, f_out, f_in, mxu_dtype):
    F = f_out
    cdt = mxu_dtype

    h = h_ref[...]                                   # (GN, F_in)   G graphs stacked on rows
    hT = hT_ref[0]                                   # (F_in, GN)   pre-transposed activations

    b_t = aux_ref[0:1, 0:F]                          # (1, F)
    b_gru = aux_ref[1:2, 0:4 * F]                    # (1, 4F)
    c2row = aux_ref[2:3, 0:f_in]                     # (1, F_in) = (W_gat @ a[F:])^T

    # ---- ONE fused projection: [W_t | W_gat | W_gat@a[:F] | 0-pad] -> 128-lane tile
    proj = jnp.dot(h.astype(cdt), wcat_ref[...].astype(cdt),
                   preferred_element_type=jnp.float32)              # (GN, 128)
    gru_in = proj[:, 0:F] + b_t                      # nn.Linear transform -> GRU hidden
    wh = proj[:, F:2 * F]                            # GAT Wh
    f1 = proj[:, 2 * F:2 * F + 1]                    # Wh @ a[:F]   (column, GN x 1)

    # f2 computed directly as a ROW on the MXU -- no column->row transpose.
    f2 = jnp.dot(c2row.astype(cdt), hT.astype(cdt),
                 preferred_element_type=jnp.float32)                 # (1, GN)

    # ---- block-diagonal edge mask, rebuilt in-kernel from compact (GN, N) adjacency:
    #   adj_full[r, c] = adj_rows[r, c mod N]   (exact copy via 0/1 matrix on the MXU)
    #   edge         = adj_full * same_graph    (kills cross-graph pairs)
    adj_full = jnp.dot(adj_ref[...], cpm_ref[...],
                       preferred_element_type=jnp.float32)           # (GN, GN)
    edge = adj_full * sg_ref[...]

    # ---- attention: e[i,j] = leakyrelu(f1[i] + f2[j]); per-graph softmax via masking.
    # NOTE: a row with no unmasked entry (no self-loop) would softmax uniformly over
    # GN columns instead of N; inputs are expected to carry self-loops (as enforced below).
    e = _leaky_relu(f1 + f2, alpha)                                  # (GN, GN)
    att = jnp.where(edge > 0, e, -9.0e15)
    m = jnp.max(att, axis=1, keepdims=True)
    p = jnp.exp(att - m)
    s = jnp.sum(p, axis=1, keepdims=True)
    # (attention dropout: identity in eval mode)
    # Normalization deferred past the MXU (row-wise scale commutes with the matmul).
    h_prime = jnp.dot(p.astype(cdt), wh.astype(cdt),
                      preferred_element_type=jnp.float32) * pl.reciprocal(s)

    # ---- GGATLayer epilogue of the GAT branch: elu + log_softmax ----
    x = _log_softmax_rows(_elu(h_prime))

    # ---- GRUCell(x, gru_in): two matmuls summed (no lane concat); gate columns r|z|gx_n|gh_n
    gates = (jnp.dot(x.astype(cdt), wgru_ref[0:F, :].astype(cdt),
                     preferred_element_type=jnp.float32)
             + jnp.dot(gru_in.astype(cdt), wgru_ref[F:2 * F, :].astype(cdt),
                       preferred_element_type=jnp.float32)
             + b_gru)                                                # (GN, 4F)
    r = jax.nn.sigmoid(gates[:, 0:F])
    z = jax.nn.sigmoid(gates[:, F:2 * F])
    n = jnp.tanh(gates[:, 2 * F:3 * F] + r * gates[:, 3 * F:4 * F])
    h_new = (1.0 - z) * n + z * gru_in

    out_ref[...] = _log_softmax_rows(h_new)


# --------------------------------- the wrapper ---------------------------------
def ggat_forward(h, adj, params, *, graphs_per_step=GRAPHS_PER_STEP,
                 mxu_dtype=jnp.float32):
    B, N, F_in = h.shape
    F = params["W_gat"].shape[1]
    G = graphs_per_step
    assert B % G == 0, "batch must be a multiple of graphs_per_step"
    Bg = B // G
    GN = G * N

    # ---- fold the small matmuls into one wide, 128-lane-padded RHS ----
    c1 = params["W_gat"] @ params["a1"]                    # (F_in, 1): h @ c1 == Wh @ a[:F]
    c2_row = (params["W_gat"] @ params["a2t"].T).T         # (1, F_in): c2_row @ h^T == (Wh @ a[F:])^T
    pad = (-(2 * F + 1)) % 128
    w_cat = jnp.concatenate(
        [params["W_t"], params["W_gat"], c1,
         jnp.zeros((F_in, pad), jnp.float32)], axis=1)     # (F_in, 128)

    # ---- GRU gate weights fused to a (2F, 4F) lane-dense layout: r | z | gx_n | gh_n
    w_ih, w_hh = params["W_ih"], params["W_hh"]
    b_ih, b_hh = params["b_ih"], params["b_hh"]
    zeros = jnp.zeros((F, F), jnp.float32)
    w_gru = jnp.concatenate(
        [jnp.concatenate([w_ih[:, :2 * F], w_ih[:, 2 * F:], zeros], axis=1),
         jnp.concatenate([w_hh[:, :2 * F], zeros, w_hh[:, 2 * F:]], axis=1)],
        axis=0)                                            # (2F, 4F)
    b_gru = jnp.concatenate([b_ih[:, :2 * F] + b_hh[:, :2 * F],
                             b_ih[:, 2 * F:], b_hh[:, 2 * F:]], axis=1)  # (1, 4F)

    # ---- pack the tiny row-vector constants into one operand ----
    aw = max(128, 4 * F)

    def _pad_row(v):
        return jnp.pad(v, ((0, 0), (0, aw - v.shape[1])))

    aux = jnp.concatenate([_pad_row(params["b_t"]), _pad_row(b_gru), _pad_row(c2_row),
                           jnp.zeros((5, aw), jnp.float32)], axis=0)     # (8, aw)

    # ---- grid-invariant mask helpers (fetched once; constant index maps) ----
    gid = jnp.repeat(jnp.arange(G, dtype=jnp.int32), N)                  # graph id per packed row
    same_graph = (gid[:, None] == gid[None, :]).astype(jnp.float32)      # (GN, GN)
    nid = jnp.tile(jnp.arange(N, dtype=jnp.int32), G)                    # node id per packed col
    copy_mat = (nid[None, :] == jnp.arange(N, dtype=jnp.int32)[:, None]).astype(jnp.float32)  # (N, GN)

    # ---- data: G graphs per step stacked along rows; compact adjacency rows only ----
    h2d = h.reshape(B * N, F_in).astype(mxu_dtype)
    hT3 = h.reshape(Bg, GN, F_in).transpose(0, 2, 1).astype(mxu_dtype)   # (Bg, F_in, GN)
    adj_rows = adj.reshape(B * N, N).astype(jnp.float32)                 # (B*N, N)
    w_cat = w_cat.astype(mxu_dtype)
    w_gru = w_gru.astype(mxu_dtype)

    kernel = functools.partial(ggat_kernel, alpha=GAT_ALPHA, f_out=F, f_in=F_in,
                               mxu_dtype=mxu_dtype)
    out2d = pl.pallas_call(
        kernel,
        out_shape=jax.ShapeDtypeStruct((B * N, F), jnp.float32),
        grid=(Bg,),
        in_specs=[
            pl.BlockSpec((GN, F_in), lambda b: (b, 0)),        # h rows
            pl.BlockSpec((1, F_in, GN), lambda b: (b, 0, 0)),  # pre-transposed h
            pl.BlockSpec((GN, N), lambda b: (b, 0)),           # compact adjacency rows
            pl.BlockSpec(w_cat.shape, lambda b: (0, 0)),       # fused projection weights
            pl.BlockSpec(w_gru.shape, lambda b: (0, 0)),       # fused GRU weights
            pl.BlockSpec(aux.shape, lambda b: (0, 0)),         # b_t | b_gru | c2_row
            pl.BlockSpec(copy_mat.shape, lambda b: (0, 0)),    # lane-expansion matrix
            pl.BlockSpec(same_graph.shape, lambda b: (0, 0)),  # block-diagonal graph mask
        ],
        out_specs=pl.BlockSpec((GN, F), lambda b: (b, 0)),
        compiler_params=pltpu.CompilerParams(
            dimension_semantics=("parallel",)),                # megacore sharding on v7x
    )(h2d, hT3, adj_rows, w_cat, w_gru, aux, copy_mat, same_graph)
    return out2d.reshape(B, N, F)


# ----------------------- pure-JAX reference (for checking) ---------------------
def ggat_reference(h, adj, params):
    gru_in = h @ params["W_t"] + params["b_t"]
    wh = h @ params["W_gat"]
    f1 = wh @ params["a1"]                 # (N, 1)
    f2 = wh @ params["a2t"].T              # (N, 1)
    e = _leaky_relu(f1 + f2.T, GAT_ALPHA)
    att = jnp.where(adj > 0, e, jnp.full_like(e, -9.0e15))
    att = jax.nn.softmax(att, axis=1)
    h_prime = att @ wh
    x = _elu(h_prime)
    x = jax.nn.log_softmax(x, axis=1)
    f = F_OUT
    gx = x @ params["W_ih"] + params["b_ih"]
    gh = gru_in @ params["W_hh"] + params["b_hh"]
    r = jax.nn.sigmoid(gx[:, :f] + gh[:, :f])
    z = jax.nn.sigmoid(gx[:, f:2 * f] + gh[:, f:2 * f])
    n = jnp.tanh(gx[:, 2 * f:] + r * gh[:, 2 * f:])
    h_new = (1.0 - z) * n + z * gru_in
    return jax.nn.log_softmax(h_new, axis=1)


# ------------------------- deterministic parameter init ------------------------
def init_params(key):
    ks = jax.random.split(key, 10)

    def xavier(k, shape, gain=1.414):
        bound = gain * (6.0 / (shape[0] + shape[1])) ** 0.5
        return jax.random.uniform(k, shape, jnp.float32, -bound, bound)

    a_full = xavier(ks[0], (2 * F_OUT, 1))              # GAT attention vector a
    gru_bound = 1.0 / (F_OUT ** 0.5)

    def gru_u(k, shape):
        return jax.random.uniform(k, shape, jnp.float32, -gru_bound, gru_bound)

    return {
        # nn.Linear transform: in_features -> out_features
        "W_t": xavier(ks[1], (F_IN, F_OUT), gain=1.0),
        "b_t": jax.random.uniform(ks[2], (1, F_OUT), jnp.float32, -0.1, 0.1),
        # GATSubLayer
        "W_gat": xavier(ks[3], (F_IN, F_OUT)),
        "a1": a_full[:F_OUT, :],                        # (F_OUT, 1)
        "a2t": a_full[F_OUT:, :].T,                     # (1, F_OUT)
        # GRUCell weights (stored transposed for right-multiplication), gate order r|z|n
        "W_ih": gru_u(ks[4], (F_OUT, 3 * F_OUT)),
        "W_hh": gru_u(ks[5], (F_OUT, 3 * F_OUT)),
        "b_ih": gru_u(ks[6], (1, 3 * F_OUT)),
        "b_hh": gru_u(ks[7], (1, 3 * F_OUT)),
    }


if __name__ == "__main__":
    key = jax.random.PRNGKey(0)
    kp, kh, ka = jax.random.split(key, 3)
    params = init_params(kp)

    h_in = jax.random.normal(kh, (B_GRAPHS, N_NODES, F_IN), jnp.float32)
    adj = (jax.random.uniform(ka, (B_GRAPHS, N_NODES, N_NODES)) > 0.5).astype(jnp.float32)
    adj = jnp.maximum(adj, jnp.eye(N_NODES, dtype=jnp.float32)[None])  # self-loops

    # f32 MXU by default; pass mxu_dtype=jnp.bfloat16 on v6e/v7x for the bandwidth win.
    out = ggat_forward(h_in, adj, params)
    out = jax.block_until_ready(out)

    ref = jax.vmap(lambda hh, aa: ggat_reference(hh, aa, params))(h_in, adj)
    assert out.shape == (B_GRAPHS, N_NODES, F_OUT)
    max_err = float(jnp.max(jnp.abs(out - ref)))
    assert jnp.allclose(out, ref, atol=2e-3, rtol=2e-3), f"max_err={max_err}"

    print("KERNEL_OK")
</pallas_src>

<mosaic_0001>
module attributes {stable_mosaic.version = 11 : i64} {
  func.func @ggat_kernel(%arg0: i32, %arg1: memref<128x16xf32, #tpu.memory_space<vmem>>, %arg2: memref<1x16x128xf32, #tpu.memory_space<vmem>>, %arg3: memref<128x8xf32, #tpu.memory_space<vmem>>, %arg4: memref<16x128xf32, #tpu.memory_space<vmem>>, %arg5: memref<64x128xf32, #tpu.memory_space<vmem>>, %arg6: memref<8x128xf32, #tpu.memory_space<vmem>>, %arg7: memref<8x128xf32, #tpu.memory_space<vmem>>, %arg8: memref<128x128xf32, #tpu.memory_space<vmem>>, %arg9: memref<128x32xf32, #tpu.memory_space<vmem>>) attributes {dimension_semantics = [#tpu.dimension_semantics<parallel>], iteration_bounds = array<i64: 4>, scalar_prefetch = 0 : i64, scratch_operands = 0 : i64, tpu.core_type = #tpu.core_type<tc>, window_params = [{transform_indices = @transform_0, window_bounds = array<i64: 128, 16>}, {transform_indices = @transform_1, window_bounds = array<i64: 1, 16, 128>}, {transform_indices = @transform_2, window_bounds = array<i64: 128, 8>}, {pipeline_mode = #tpu.pipeline_mode<synchronous>, transform_indices = @transform_3, window_bounds = array<i64: 16, 128>}, {pipeline_mode = #tpu.pipeline_mode<synchronous>, transform_indices = @transform_4, window_bounds = array<i64: 64, 128>}, {pipeline_mode = #tpu.pipeline_mode<synchronous>, transform_indices = @transform_5, window_bounds = array<i64: 8, 128>}, {pipeline_mode = #tpu.pipeline_mode<synchronous>, transform_indices = @transform_6, window_bounds = array<i64: 8, 128>}, {pipeline_mode = #tpu.pipeline_mode<synchronous>, transform_indices = @transform_7, window_bounds = array<i64: 128, 128>}, {transform_indices = @transform_8, window_bounds = array<i64: 128, 32>}]} {
    %c0 = arith.constant 0 : index
    %c0_0 = arith.constant 0 : index
    %0 = vector.load %arg1[%c0, %c0_0] : memref<128x16xf32, #tpu.memory_space<vmem>>, vector<128x16xf32>
    %c0_1 = arith.constant 0 : index
    %c0_2 = arith.constant 0 : index
    %c0_3 = arith.constant 0 : index
    %1 = vector.load %arg2[%c0_1, %c0_2, %c0_3] : memref<1x16x128xf32, #tpu.memory_space<vmem>>, vector<1x16x128xf32>
    %2 = vector.shape_cast %1 : vector<1x16x128xf32> to vector<16x128xf32>
    %c0_4 = arith.constant 0 : index
    %c0_5 = arith.constant 0 : index
    %3 = vector.load %arg6[%c0_4, %c0_5] : memref<8x128xf32, #tpu.memory_space<vmem>>, vector<1x32xf32>
    %c1 = arith.constant 1 : index
    %c0_6 = arith.constant 0 : index
    %4 = vector.load %arg6[%c1, %c0_6] : memref<8x128xf32, #tpu.memory_space<vmem>>, vector<1x128xf32>
    %c2 = arith.constant 2 : index
    %c0_7 = arith.constant 0 : index
    %5 = vector.load %arg6[%c2, %c0_7] : memref<8x128xf32, #tpu.memory_space<vmem>>, vector<1x16xf32>
    %c0_8 = arith.constant 0 : index
    %c0_9 = arith.constant 0 : index
    %6 = vector.load %arg4[%c0_8, %c0_9] : memref<16x128xf32, #tpu.memory_space<vmem>>, vector<16x128xf32>
    %cst = arith.constant dense<0.000000e+00> : vector<128x128xf32>
    %7 = tpu.matmul %0, %6, %cst {dimension_numbers = #tpu.dot_dimension_numbers<[1], [0], [0], [1], [0, 0, 1, 1], [], []>} : vector<128x16xf32>, vector<16x128xf32>, vector<128x128xf32> -> vector<128x128xf32>
    %8 = vector.extract_strided_slice %7 {offsets = [0, 0], sizes = [128, 32], strides = [1, 1]} : vector<128x128xf32> to vector<128x32xf32>
    %9 = vector.broadcast %3 : vector<1x32xf32> to vector<128x32xf32>
    %10 = arith.addf %8, %9 : vector<128x32xf32>
    %11 = vector.extract_strided_slice %7 {offsets = [0, 32], sizes = [128, 32], strides = [1, 1]} : vector<128x128xf32> to vector<128x32xf32>
    %12 = vector.extract_strided_slice %7 {offsets = [0, 64], sizes = [128, 1], strides = [1, 1]} : vector<128x128xf32> to vector<128x1xf32>
    %cst_10 = arith.constant dense<0.000000e+00> : vector<1x128xf32>
    %13 = tpu.matmul %5, %2, %cst_10 {dimension_numbers = #tpu.dot_dimension_numbers<[1], [0], [0], [1], [0, 0, 1, 1], [], []>} : vector<1x16xf32>, vector<16x128xf32>, vector<1x128xf32> -> vector<1x128xf32>
    %c0_11 = arith.constant 0 : index
    %c0_12 = arith.constant 0 : index
    %14 = vector.load %arg3[%c0_11, %c0_12] : memref<128x8xf32, #tpu.memory_space<vmem>>, vector<128x8xf32>
    %c0_13 = arith.constant 0 : index
    %c0_14 = arith.constant 0 : index
    %15 = vector.load %arg7[%c0_13, %c0_14] : memref<8x128xf32, #tpu.memory_space<vmem>>, vector<8x128xf32>
    %cst_15 = arith.constant dense<0.000000e+00> : vector<128x128xf32>
    %16 = tpu.matmul %14, %15, %cst_15 {dimension_numbers = #tpu.dot_dimension_numbers<[1], [0], [0], [1], [0, 0, 1, 1], [], []>} : vector<128x8xf32>, vector<8x128xf32>, vector<128x128xf32> -> vector<128x128xf32>
    %c0_16 = arith.constant 0 : index
    %c0_17 = arith.constant 0 : index
    %17 = vector.load %arg8[%c0_16, %c0_17] : memref<128x128xf32, #tpu.memory_space<vmem>>, vector<128x128xf32>
    %18 = arith.mulf %16, %17 : vector<128x128xf32>
    %19 = vector.broadcast %12 : vector<128x1xf32> to vector<128x128xf32>
    %20 = vector.broadcast %13 : vector<1x128xf32> to vector<128x128xf32>
    %21 = arith.addf %19, %20 : vector<128x128xf32>
    %cst_18 = arith.constant 0.000000e+00 : f32
    %22 = vector.broadcast %cst_18 : f32 to vector<128x128xf32>
    %23 = arith.cmpf oge, %21, %22 : vector<128x128xf32>
    %cst_19 = arith.constant 2.000000e-01 : f32
    %24 = vector.broadcast %cst_19 : f32 to vector<128x128xf32>
    %25 = arith.mulf %24, %21 : vector<128x128xf32>
    %26 = arith.select %23, %21, %25 : vector<128x128xi1>, vector<128x128xf32>
    %cst_20 = arith.constant 0.000000e+00 : f32
    %27 = vector.broadcast %cst_20 : f32 to vector<128x128xf32>
    %28 = arith.cmpf ogt, %18, %27 : vector<128x128xf32>
    %cst_21 = arith.constant -9.000000e+15 : f32
    %29 = vector.broadcast %cst_21 : f32 to vector<128x128xf32>
    %30 = arith.select %28, %26, %29 : vector<128x128xi1>, vector<128x128xf32>
    %cst_22 = arith.constant dense<0xFF800000> : vector<128xf32>
    %31 = vector.multi_reduction <maximumf>, %30, %cst_22 [1] : vector<128x128xf32> to vector<128xf32>
    %32 = vector.shape_cast %31 : vector<128xf32> to vector<128x1xf32>
    %33 = vector.broadcast %32 : vector<128x1xf32> to vector<128x128xf32>
    %34 = arith.subf %30, %33 : vector<128x128xf32>
    %35 = math.exp %34 : vector<128x128xf32>
    %cst_23 = arith.constant dense<0.000000e+00> : vector<128xf32>
    %36 = vector.multi_reduction <add>, %35, %cst_23 [1] : vector<128x128xf32> to vector<128xf32>
    %37 = vector.shape_cast %36 : vector<128xf32> to vector<128x1xf32>
    %cst_24 = arith.constant dense<0.000000e+00> : vector<128x32xf32>
    %38 = tpu.matmul %35, %11, %cst_24 {dimension_numbers = #tpu.dot_dimension_numbers<[1], [0], [0], [1], [0, 0, 1, 1], [], []>} : vector<128x128xf32>, vector<128x32xf32>, vector<128x32xf32> -> vector<128x32xf32>
    %39 = tpu.reciprocal %37 : vector<128x1xf32> -> vector<128x1xf32>
    %40 = vector.broadcast %39 : vector<128x1xf32> to vector<128x32xf32>
    %41 = arith.mulf %38, %40 : vector<128x32xf32>
    %cst_25 = arith.constant 0.000000e+00 : f32
    %42 = vector.broadcast %cst_25 : f32 to vector<128x32xf32>
    %43 = arith.cmpf ogt, %41, %42 : vector<128x32xf32>
    %cst_26 = arith.constant 0.000000e+00 : f32
    %44 = vector.broadcast %cst_26 : f32 to vector<128x32xf32>
    %45 = arith.minimumf %41, %44 : vector<128x32xf32>
    %46 = math.exp %45 : vector<128x32xf32>
    %cst_27 = arith.constant 1.000000e+00 : f32
    %47 = vector.broadcast %cst_27 : f32 to vector<128x32xf32>
    %48 = arith.subf %46, %47 : vector<128x32xf32>
    %49 = arith.select %43, %41, %48 : vector<128x32xi1>, vector<128x32xf32>
    %cst_28 = arith.constant dense<0xFF800000> : vector<128xf32>
    %50 = vector.multi_reduction <maximumf>, %49, %cst_28 [1] : vector<128x32xf32> to vector<128xf32>
    %51 = vector.shape_cast %50 : vector<128xf32> to vector<128x1xf32>
    %52 = vector.broadcast %51 : vector<128x1xf32> to vector<128x32xf32>
    %53 = arith.subf %49, %52 : vector<128x32xf32>
    %54 = math.exp %53 : vector<128x32xf32>
    %cst_29 = arith.constant dense<0.000000e+00> : vector<128xf32>
    %55 = vector.multi_reduction <add>, %54, %cst_29 [1] : vector<128x32xf32> to vector<128xf32>
    %56 = vector.shape_cast %55 : vector<128xf32> to vector<128x1xf32>
    %57 = math.log %56 : vector<128x1xf32>
    %58 = vector.broadcast %57 : vector<128x1xf32> to vector<128x32xf32>
    %59 = arith.subf %53, %58 : vector<128x32xf32>
    %c0_30 = arith.constant 0 : index
    %c0_31 = arith.constant 0 : index
    %60 = vector.load %arg5[%c0_30, %c0_31] : memref<64x128xf32, #tpu.memory_space<vmem>>, vector<32x128xf32>
    %cst_32 = arith.constant dense<0.000000e+00> : vector<128x128xf32>
    %61 = tpu.matmul %59, %60, %cst_32 {dimension_numbers = #tpu.dot_dimension_numbers<[1], [0], [0], [1], [0, 0, 1, 1], [], []>} : vector<128x32xf32>, vector<32x128xf32>, vector<128x128xf32> -> vector<128x128xf32>
    %c32 = arith.constant 32 : index
    %c0_33 = arith.constant 0 : index
    %62 = vector.load %arg5[%c32, %c0_33] : memref<64x128xf32, #tpu.memory_space<vmem>>, vector<32x128xf32>
    %cst_34 = arith.constant dense<0.000000e+00> : vector<128x128xf32>
    %63 = tpu.matmul %10, %62, %cst_34 {dimension_numbers = #tpu.dot_dimension_numbers<[1], [0], [0], [1], [0, 0, 1, 1], [], []>} : vector<128x32xf32>, vector<32x128xf32>, vector<128x128xf32> -> vector<128x128xf32>
    %64 = arith.addf %61, %63 : vector<128x128xf32>
    %65 = vector.broadcast %4 : vector<1x128xf32> to vector<128x128xf32>
    %66 = arith.addf %64, %65 : vector<128x128xf32>
    %67 = vector.extract_strided_slice %66 {offsets = [0, 0], sizes = [128, 32], strides = [1, 1]} : vector<128x128xf32> to vector<128x32xf32>
    %68 = arith.negf %67 : vector<128x32xf32>
    %69 = math.exp %68 : vector<128x32xf32>
    %cst_35 = arith.constant 1.000000e+00 : f32
    %70 = vector.broadcast %cst_35 : f32 to vector<128x32xf32>
    %71 = arith.addf %70, %69 : vector<128x32xf32>
    %72 = arith.divf %70, %71 : vector<128x32xf32>
    %73 = vector.extract_strided_slice %66 {offsets = [0, 32], sizes = [128, 32], strides = [1, 1]} : vector<128x128xf32> to vector<128x32xf32>
    %74 = arith.negf %73 : vector<128x32xf32>
    %75 = math.exp %74 : vector<128x32xf32>
    %cst_36 = arith.constant 1.000000e+00 : f32
    %76 = vector.broadcast %cst_36 : f32 to vector<128x32xf32>
    %77 = arith.addf %76, %75 : vector<128x32xf32>
    %78 = arith.divf %76, %77 : vector<128x32xf32>
    %79 = vector.extract_strided_slice %66 {offsets = [0, 64], sizes = [128, 32], strides = [1, 1]} : vector<128x128xf32> to vector<128x32xf32>
    %80 = vector.extract_strided_slice %66 {offsets = [0, 96], sizes = [128, 32], strides = [1, 1]} : vector<128x128xf32> to vector<128x32xf32>
    %81 = arith.mulf %72, %80 : vector<128x32xf32>
    %82 = arith.addf %79, %81 : vector<128x32xf32>
    %83 = math.tanh %82 : vector<128x32xf32>
    %cst_37 = arith.constant 1.000000e+00 : f32
    %84 = vector.broadcast %cst_37 : f32 to vector<128x32xf32>
    %85 = arith.subf %84, %78 : vector<128x32xf32>
    %86 = arith.mulf %85, %83 : vector<128x32xf32>
    %87 = arith.mulf %78, %10 : vector<128x32xf32>
    %88 = arith.addf %86, %87 : vector<128x32xf32>
    %cst_38 = arith.constant dense<0xFF800000> : vector<128xf32>
    %89 = vector.multi_reduction <maximumf>, %88, %cst_38 [1] : vector<128x32xf32> to vector<128xf32>
    %90 = vector.shape_cast %89 : vector<128xf32> to vector<128x1xf32>
    %91 = vector.broadcast %90 : vector<128x1xf32> to vector<128x32xf32>
    %92 = arith.subf %88, %91 : vector<128x32xf32>
    %93 = math.exp %92 : vector<128x32xf32>
    %cst_39 = arith.constant dense<0.000000e+00> : vector<128xf32>
    %94 = vector.multi_reduction <add>, %93, %cst_39 [1] : vector<128x32xf32> to vector<128xf32>
    %95 = vector.shape_cast %94 : vector<128xf32> to vector<128x1xf32>
    %96 = math.log %95 : vector<128x1xf32>
    %97 = vector.broadcast %96 : vector<128x1xf32> to vector<128x32xf32>
    %98 = arith.subf %92, %97 : vector<128x32xf32>
    %c0_40 = arith.constant 0 : index
    %c0_41 = arith.constant 0 : index
    %99 = vector.load %arg9[%c0_40, %c0_41] : memref<128x32xf32, #tpu.memory_space<vmem>>, vector<128x32xf32>
    tpu.vector_store %arg9[%c0_40, %c0_41], %98 {strides = array<i32>} : memref<128x32xf32, #tpu.memory_space<vmem>>, vector<128x32xf32>,
    return
  }
  func.func @transform_0(%arg0: i32) -> (i32, i32) {
    %c0_i32 = arith.constant 0 : i32
    %c0_i32_0 = arith.constant 0 : i32
    return %arg0, %c0_i32 : i32, i32
  }
  func.func @transform_1(%arg0: i32) -> (i32, i32, i32) {
    %c0_i32 = arith.constant 0 : i32
    %c0_i32_0 = arith.constant 0 : i32
    %c0_i32_1 = arith.constant 0 : i32
    return %arg0, %c0_i32, %c0_i32_0 : i32, i32, i32
  }
  func.func @transform_2(%arg0: i32) -> (i32, i32) {
    %c0_i32 = arith.constant 0 : i32
    %c0_i32_0 = arith.constant 0 : i32
    return %arg0, %c0_i32 : i32, i32
  }
  func.func @transform_3(%arg0: i32) -> (i32, i32) {
    %c0_i32 = arith.constant 0 : i32
    %c0_i32_0 = arith.constant 0 : i32
    %c0_i32_1 = arith.constant 0 : i32
    return %c0_i32, %c0_i32_0 : i32, i32
  }
  func.func @transform_4(%arg0: i32) -> (i32, i32) {
    %c0_i32 = arith.constant 0 : i32
    %c0_i32_0 = arith.constant 0 : i32
    %c0_i32_1 = arith.constant 0 : i32
    return %c0_i32, %c0_i32_0 : i32, i32
  }
  func.func @transform_5(%arg0: i32) -> (i32, i32) {
    %c0_i32 = arith.constant 0 : i32
    %c0_i32_0 = arith.constant 0 : i32
    %c0_i32_1 = arith.constant 0 : i32
    return %c0_i32, %c0_i32_0 : i32, i32
  }
  func.func @transform_6(%arg0: i32) -> (i32, i32) {
    %c0_i32 = arith.constant 0 : i32
    %c0_i32_0 = arith.constant 0 : i32
    %c0_i32_1 = arith.constant 0 : i32
    return %c0_i32, %c0_i32_0 : i32, i32
  }
  func.func @transform_7(%arg0: i32) -> (i32, i32) {
    %c0_i32 = arith.constant 0 : i32
    %c0_i32_0 = arith.constant 0 : i32
    %c0_i32_1 = arith.constant 0 : i32
    return %c0_i32, %c0_i32_0 : i32, i32
  }
  func.func @transform_8(%arg0: i32) -> (i32, i32) {
    %c0_i32 = arith.constant 0 : i32
    %c0_i32_0 = arith.constant 0 : i32
    return %arg0, %c0_i32 : i32, i32
  }
}

</mosaic_0001>

<llo_original>
// kernel: tpu_custom_call.1
$region0: #{tpu_custom_call.1}
  #allocation0 [shape = 'u32[]', space=smem, size = 0x4, offset = 0x4, fixed_abs, tag = 'smem constant byte address 0x4 - core index']
  #allocation1 [shape = 'u32[144,128]{1,0:T(1,128)}', space=vmem, size = 0x12000, scoped, tag = 'internal scratch']
  %s0 = inlined_call_operand.vmem [shape: f32[512,16], index: 0, kind: input, shape index: {}]
  %s1 = inlined_call_operand.vmem [shape: f32[4,16,128], index: 1, kind: input, shape index: {}]
  %s2 = inlined_call_operand.vmem [shape: f32[512,8], index: 2, kind: input, shape index: {}]
  %s3 = inlined_call_operand.vmem [shape: f32[16,128], index: 3, kind: input, shape index: {}]
  %s4 = inlined_call_operand.vmem [shape: f32[64,128], index: 4, kind: input, shape index: {}]
  %s5 = inlined_call_operand.vmem [shape: f32[8,128], index: 5, kind: input, shape index: {}]
  %s6 = inlined_call_operand.vmem [shape: f32[8,128], index: 6, kind: input, shape index: {}]
  %s7 = inlined_call_operand.vmem [shape: f32[128,128], index: 7, kind: input, shape index: {}]
  %s8 = inlined_call_operand.vmem [shape: f32[512,32], index: 8, kind: output, shape index: {}]
  %s9 = sld [smem:[#allocation0]]
  $region65: #{tpu_custom_call.1} parent=0
    _
  %s11 = ssub.s32 1, %s9
  %s12 = scalar_select 0, %s11, %s9
  loop: start=0, step=1, limit=6
  $region2: #{tpu_custom_call.1} parent=0 // loop_pre_header
    _
  $region3: #{tpu_custom_call.1} parent=0 // loop_header
    %s14 = sphi 0, %s18
    %p15 = scmp.ge.s32.totalorder %s14, 6
    %s24 = sphi 0, %s26
    %s27 = sphi 0, %s24
    %s28 = sphi 0, %s27
    %s44 = sphi 0, %s28
    %s50 = sphi 0, %s52
    %s53 = sphi 0, %s50
    %s54 = sphi 0, %s53
    %s70 = sphi 0, %s54
    %s76 = sphi 0, %s78
    %s79 = sphi 0, %s76
    %s80 = sphi 0, %s79
    %s96 = sphi 0, %s80
    %s100 = sphi 0, %s100
    %s102 = sphi 0, %s100
    %s103 = sphi 0, %s102
    %s117 = sphi 0, %s103
    %s121 = sphi 0, %s121
    %s123 = sphi 0, %s121
    %s124 = sphi 0, %s123
    %s138 = sphi 0, %s124
    %s142 = sphi 0, %s142
    %s144 = sphi 0, %s142
    %s145 = sphi 0, %s144
    %s159 = sphi 0, %s145
    %s163 = sphi 0, %s163
    %s165 = sphi 0, %s163
    %s166 = sphi 0, %s165
    %s180 = sphi 0, %s166
    %s184 = sphi 0, %s184
    %s186 = sphi 0, %s184
    %s187 = sphi 0, %s186
    %s201 = sphi 0, %s187
    %s207 = sphi 0, %s209
    %s210 = sphi 0, %s207
    %s211 = sphi 0, %s210
    %s227 = sphi 0, %s211
  $region4: #{tpu_custom_call.1} parent=0 // loop_header_branch
    %17 = sbr.rel (%p15) target = $region8
  $region5: #{tpu_custom_call.1} parent=0 // loop_body
    %s19 = ssub.s32 %s14, 1
    %s20 = ssub.s32 %s14, 2
    %s21 = sadd.s32 %s14, 1
    %s22 = ssub.s32 %s14, %s21
    %p23 = scmp.eq.s32.totalorder %s22, 0
    %s25 = sadd.s32 %s24, 1
    %s26 = scalar_select %p23, %s24, %s25
    %p29 = pneg %p23
    %p30 = scmp.eq.s32.totalorder %s14, 3
    %p31 = por %p29, %p30
    %p32 = scmp.ne.s32.totalorder %s24, %s27
    %p33 = scmp.eq.s32.totalorder %s14, 0
    %p34 = por %p32, %p33
    %p35 = scmp.ne.s32.totalorder %s24, %s27
    %p36 = scmp.eq.s32.totalorder %s19, 3
    %p37 = por %p35, %p36
    %p38 = scmp.ne.s32.totalorder %s27, %s28
    %p39 = scmp.eq.s32.totalorder %s19, 0
    %p40 = por %p38, %p39
    %p41 = scmp.ne.s32.totalorder %s27, %s28
    %p42 = scmp.eq.s32.totalorder %s20, 3
    %p43 = por %p41, %p42
    %p45 = scmp.ne.s32.totalorder %s28, %s44
    %p46 = scmp.eq.s32.totalorder %s20, 0
    %p47 = por %p45, %p46
    %s48 = ssub.s32 %s14, %s21
    %p49 = scmp.eq.s32.totalorder %s48, 0
    %s51 = sadd.s32 %s50, 1
    %s52 = scalar_select %p49, %s50, %s51
    %p55 = pneg %p49
    %p56 = scmp.eq.s32.totalorder %s14, 3
    %p57 = por %p55, %p56
    %p58 = scmp.ne.s32.totalorder %s50, %s53
    %p59 = scmp.eq.s32.totalorder %s14, 0
    %p60 = por %p58, %p59
    %p61 = scmp.ne.s32.totalorder %s50, %s53
    %p62 = scmp.eq.s32.totalorder %s19, 3
    %p63 = por %p61, %p62
    %p64 = scmp.ne.s32.totalorder %s53, %s54
    %p65 = scmp.eq.s32.totalorder %s19, 0
    %p66 = por %p64, %p65
    %p67 = scmp.ne.s32.totalorder %s53, %s54
    %p68 = scmp.eq.s32.totalorder %s20, 3
    %p69 = por %p67, %p68
    %p71 = scmp.ne.s32.totalorder %s54, %s70
    %p72 = scmp.eq.s32.totalorder %s20, 0
    %p73 = por %p71, %p72
    %s74 = ssub.s32 %s14, %s21
    %p75 = scmp.eq.s32.totalorder %s74, 0
    %s77 = sadd.s32 %s76, 1
    %s78 = scalar_select %p75, %s76, %s77
    %p81 = pneg %p75
    %p82 = scmp.eq.s32.totalorder %s14, 3
    %p83 = por %p81, %p82
    %p84 = scmp.ne.s32.totalorder %s76, %s79
    %p85 = scmp.eq.s32.totalorder %s14, 0
    %p86 = por %p84, %p85
    %p87 = scmp.ne.s32.totalorder %s76, %s79
    %p88 = scmp.eq.s32.totalorder %s19, 3
    %p89 = por %p87, %p88
    %p90 = scmp.ne.s32.totalorder %s79, %s80
    %p91 = scmp.eq.s32.totalorder %s19, 0
    %p92 = por %p90, %p91
    %p93 = scmp.ne.s32.totalorder %s79, %s80
    %p94 = scmp.eq.s32.totalorder %s20, 3
    %p95 = por %p93, %p94
    %p97 = scmp.ne.s32.totalorder %s80, %s96
    %p98 = scmp.eq.s32.totalorder %s20, 0
    %p99 = por %p97, %p98
    %s101 = sadd.s32 %s100, 1
    %p104 = scmp.eq.s32.totalorder %s14, 3
    %p105 = scmp.ne.s32.totalorder %s100, %s102
    %p106 = scmp.eq.s32.totalorder %s14, 0
    %p107 = por %p105, %p106
    %p108 = scmp.ne.s32.totalorder %s100, %s102
    %p109 = scmp.eq.s32.totalorder %s19, 3
    %p110 = por %p108, %p109
    %p111 = scmp.ne.s32.totalorder %s102, %s103
    %p112 = scmp.eq.s32.totalorder %s19, 0
    %p113 = por %p111, %p112
    %p114 = scmp.ne.s32.totalorder %s102, %s103
    %p115 = scmp.eq.s32.totalorder %s20, 3
    %p116 = por %p114, %p115
    %p118 = scmp.ne.s32.totalorder %s103, %s117
    %p119 = scmp.eq.s32.totalorder %s20, 0
    %p120 = por %p118, %p119
    %s122 = sadd.s32 %s121, 1
    %p125 = scmp.eq.s32.totalorder %s14, 3
    %p126 = scmp.ne.s32.totalorder %s121, %s123
    %p127 = scmp.eq.s32.totalorder %s14, 0
    %p128 = por %p126, %p127
    %p129 = scmp.ne.s32.totalorder %s121, %s123
    %p130 = scmp.eq.s32.totalorder %s19, 3
    %p131 = por %p129, %p130
    %p132 = scmp.ne.s32.totalorder %s123, %s124
    %p133 = scmp.eq.s32.totalorder %s19, 0
    %p134 = por %p132, %p133
    %p135 = scmp.ne.s32.totalorder %s123, %s124
    %p136 = scmp.eq.s32.totalorder %s20, 3
    %p137 = por %p135, %p136
    %p139 = scmp.ne.s32.totalorder %s124, %s138
    %p140 = scmp.eq.s32.totalorder %s20, 0
    %p141 = por %p139, %p140
    %s143 = sadd.s32 %s142, 1
    %p146 = scmp.eq.s32.totalorder %s14, 3
    %p147 = scmp.ne.s32.totalorder %s142, %s144
    %p148 = scmp.eq.s32.totalorder %s14, 0
    %p149 = por %p147, %p148
    %p150 = scmp.ne.s32.totalorder %s142, %s144
    %p151 = scmp.eq.s32.totalorder %s19, 3
    %p152 = por %p150, %p151
    %p153 = scmp.ne.s32.totalorder %s144, %s145
    %p154 = scmp.eq.s32.totalorder %s19, 0
    %p155 = por %p153, %p154
    %p156 = scmp.ne.s32.totalorder %s144, %s145
    %p157 = scmp.eq.s32.totalorder %s20, 3
    %p158 = por %p156, %p157
    %p160 = scmp.ne.s32.totalorder %s145, %s159
    %p161 = scmp.eq.s32.totalorder %s20, 0
    %p162 = por %p160, %p161
    %s164 = sadd.s32 %s163, 1
    %p167 = scmp.eq.s32.totalorder %s14, 3
    %p168 = scmp.ne.s32.totalorder %s163, %s165
    %p169 = scmp.eq.s32.totalorder %s14, 0
    %p170 = por %p168, %p169
    %p171 = scmp.ne.s32.totalorder %s163, %s165
    %p172 = scmp.eq.s32.totalorder %s19, 3
    %p173 = por %p171, %p172
    %p174 = scmp.ne.s32.totalorder %s165, %s166
    %p175 = scmp.eq.s32.totalorder %s19, 0
    %p176 = por %p174, %p175
    %p177 = scmp.ne.s32.totalorder %s165, %s166
    %p178 = scmp.eq.s32.totalorder %s20, 3
    %p179 = por %p177, %p178
    %p181 = scmp.ne.s32.totalorder %s166, %s180
    %p182 = scmp.eq.s32.totalorder %s20, 0
    %p183 = por %p181, %p182
    %s185 = sadd.s32 %s184, 1
    %p188 = scmp.eq.s32.totalorder %s14, 3
    %p189 = scmp.ne.s32.totalorder %s184, %s186
    %p190 = scmp.eq.s32.totalorder %s14, 0
    %p191 = por %p189, %p190
    %p192 = scmp.ne.s32.totalorder %s184, %s186
    %p193 = scmp.eq.s32.totalorder %s19, 3
    %p194 = por %p192, %p193
    %p195 = scmp.ne.s32.totalorder %s186, %s187
    %p196 = scmp.eq.s32.totalorder %s19, 0
    %p197 = por %p195, %p196
    %p198 = scmp.ne.s32.totalorder %s186, %s187
    %p199 = scmp.eq.s32.totalorder %s20, 3
    %p200 = por %p198, %p199
    %p202 = scmp.ne.s32.totalorder %s187, %s201
    %p203 = scmp.eq.s32.totalorder %s20, 0
    %p204 = por %p202, %p203
    %s205 = ssub.s32 %s14, %s21
    %p206 = scmp.eq.s32.totalorder %s205, 0
    %s208 = sadd.s32 %s207, 1
    %s209 = scalar_select %p206, %s207, %s208
    %p212 = pneg %p206
    %p213 = scmp.eq.s32.totalorder %s14, 3
    %p214 = por %p212, %p213
    %p215 = scmp.ne.s32.totalorder %s207, %s210
    %p216 = scmp.eq.s32.totalorder %s14, 0
    %p217 = por %p215, %p216
    %p218 = scmp.ne.s32.totalorder %s207, %s210
    %p219 = scmp.eq.s32.totalorder %s19, 3
    %p220 = por %p218, %p219
    %p221 = scmp.ne.s32.totalorder %s210, %s211
    %p222 = scmp.eq.s32.totalorder %s19, 0
    %p223 = por %p221, %p222
    %p224 = scmp.ne.s32.totalorder %s210, %s211
    %p225 = scmp.eq.s32.totalorder %s20, 3
    %p226 = por %p224, %p225
    %p228 = scmp.ne.s32.totalorder %s211, %s227
    %p229 = scmp.eq.s32.totalorder %s20, 0
    %p230 = por %p228, %p229
    %p231 = scmp.le.s32.totalorder 1, %s14
    %p232 = scmp.lt.s32.totalorder %s14, 5
    %p233 = pnand %p231, %p232
    %p234 = pneg %p233
    // Predicated region
    $region9: #{tpu_custom_call.1} parent=5 // pred_check
      _
    $region10: #{tpu_custom_call.1} parent=5 // pred_check_branch
      %236 = sbr.rel (%p233) target = $region12
    $region11: #{tpu_custom_call.1} parent=5 // pred_region
      %s237 = ssub.s32 %s14, 1
      // Predicated region
      $region13: #{tpu_custom_call.1} parent=11 // pred_check
        %p238 = pneg %p113
      $region14: #{tpu_custom_call.1} parent=11 // pred_check_branch
        %240 = sbr.rel (%p238) target = $region16
      $region15: #{tpu_custom_call.1} parent=11 // pred_region
        _
      $region16: #{tpu_custom_call.1} parent=11 // pred_fallthru
        _
      // Predicated region
      $region17: #{tpu_custom_call.1} parent=11 // pred_check
        %p241 = pneg %p134
      $region18: #{tpu_custom_call.1} parent=11 // pred_check_branch
        %243 = sbr.rel (%p241) target = $region20
      $region19: #{tpu_custom_call.1} parent=11 // pred_region
        _
      $region20: #{tpu_custom_call.1} parent=11 // pred_fallthru
        _
      // Predicated region
      $region21: #{tpu_custom_call.1} parent=11 // pred_check
        %p244 = pneg %p155
      $region22: #{tpu_custom_call.1} parent=11 // pred_check_branch
        %246 = sbr.rel (%p244) target = $region24
      $region23: #{tpu_custom_call.1} parent=11 // pred_region
        _
      $region24: #{tpu_custom_call.1} parent=11 // pred_fallthru
        _
      // Predicated region
      $region25: #{tpu_custom_call.1} parent=11 // pred_check
        %p247 = pneg %p176
      $region26: #{tpu_custom_call.1} parent=11 // pred_check_branch
        %249 = sbr.rel (%p247) target = $region28
      $region27: #{tpu_custom_call.1} parent=11 // pred_region
        _
      $region28: #{tpu_custom_call.1} parent=11 // pred_fallthru
        _
      // Predicated region
      $region29: #{tpu_custom_call.1} parent=11 // pred_check
        %p250 = pneg %p197
      $region30: #{tpu_custom_call.1} parent=11 // pred_check_branch
        %252 = sbr.rel (%p250) target = $region32
      $region31: #{tpu_custom_call.1} parent=11 // pred_region
        _
      $region32: #{tpu_custom_call.1} parent=11 // pred_fallthru
        _
    $region12: #{tpu_custom_call.1} parent=5 // pred_fallthru
      _
    %p253 = scmp.lt.s32.totalorder %s14, 4
    // Predicated region
    $region33: #{tpu_custom_call.1} parent=5 // pred_check
      %p254 = pneg %p253
    $region34: #{tpu_custom_call.1} parent=5 // pred_check_branch
      %256 = sbr.rel (%p254) target = $region36
    $region35: #{tpu_custom_call.1} parent=5 // pred_region
      // Predicated region
      $region37: #{tpu_custom_call.1} parent=35 // pred_check
        %p257 = pneg %p34
      $region38: #{tpu_custom_call.1} parent=35 // pred_check_branch
        %259 = sbr.rel (%p257) target = $region40
      $region39: #{tpu_custom_call.1} parent=35 // pred_region
        %s260 = smul.u32 16, %s14
        %p261 = scmp.lt.s32.totalorder %s260, 63
        %s262 = scalar_select %p261, %s260, 63
        %s263 = smul.addr %s262, 8
        %s264 = scalar_lea.vmem %s0, %s263
        %s265 = smul.u32 16, %s14
      $region40: #{tpu_custom_call.1} parent=35 // pred_fallthru
        _
      // Predicated region
      $region41: #{tpu_custom_call.1} parent=35 // pred_check
        %p266 = pneg %p60
      $region42: #{tpu_custom_call.1} parent=35 // pred_check_branch
        %268 = sbr.rel (%p266) target = $region44
      $region43: #{tpu_custom_call.1} parent=35 // pred_region
        %p269 = scmp.lt.s32.totalorder %s14, 3
        %s270 = scalar_select %p269, %s14, 3
        %s271 = smul.addr %s270, 2
        %s272 = smul.addr %s271, 8
        %s273 = scalar_lea.vmem %s1, %s272
      $region44: #{tpu_custom_call.1} parent=35 // pred_fallthru
        _
      // Predicated region
      $region45: #{tpu_custom_call.1} parent=35 // pred_check
        %p274 = pneg %p86
      $region46: #{tpu_custom_call.1} parent=35 // pred_check_branch
        %276 = sbr.rel (%p274) target = $region48
      $region47: #{tpu_custom_call.1} parent=35 // pred_region
        %s277 = smul.u32 16, %s14
        %p278 = scmp.lt.s32.totalorder %s277, 63
        %s279 = scalar_select %p278, %s277, 63
        %s280 = smul.addr %s279, 8
        %s281 = scalar_lea.vmem %s2, %s280
        %s282 = smul.u32 16, %s14
      $region48: #{tpu_custom_call.1} parent=35 // pred_fallthru
        _
    $region36: #{tpu_custom_call.1} parent=5 // pred_fallthru
      _
    %p283 = scmp.le.s32.totalorder 1, %s14
    %p284 = scmp.lt.s32.totalorder %s14, 5
    %p285 = pnand %p283, %p284
    %p286 = pneg %p285
    // Predicated region
    $region49: #{tpu_custom_call.1} parent=5 // pred_check
      _
    $region50: #{tpu_custom_call.1} parent=5 // pred_check_branch
      %288 = sbr.rel (%p285) target = $region52
    $region51: #{tpu_custom_call.1} parent=5 // pred_region
      %s289 = ssub.s32 %s14, 1
      %s290 = smul.u32 16, %s19
      %p291 = scmp.lt.s32.totalorder %s290, 63
      %s292 = scalar_select %p291, %s290, 63
      %s293 = smul.addr %s292, 8
      %s294 = scalar_lea.vmem %s0, %s293
      %p295 = pneg %p40
      %p296 = pneg %p37
      %p297 = scmp.lt.s32.totalorder %s19, 3
      %s298 = scalar_select %p297, %s19, 3
      %s299 = smul.addr %s298, 2
      %s300 = smul.addr %s299, 8
      %s301 = scalar_lea.vmem %s1, %s300
      %p302 = pneg %p66
      %p303 = pneg %p63
      %s304 = smul.u32 16, %s19
      %p305 = scmp.lt.s32.totalorder %s304, 63
      %s306 = scalar_select %p305, %s304, 63
      %s307 = smul.addr %s306, 8
      %s308 = scalar_lea.vmem %s2, %s307
      %p309 = pneg %p92
      %p310 = pneg %p89
      %p311 = pneg %p113
      %p312 = pneg %p110
      %p313 = pneg %p134
      %p314 = pneg %p131
      %p315 = pneg %p155
      %p316 = pneg %p152
      %p317 = pneg %p176
      %p318 = pneg %p173
      %p319 = pneg %p197
      %p320 = pneg %p194
      %p321 = pneg %p223
      %p322 = pneg %p220
      %s323 = smul.u32 16, %s19
      %p324 = scmp.lt.s32.totalorder %s323, 63
      %s325 = scalar_select %p324, %s323, 63
      %s326 = smul.addr %s325, 8
      %s327 = scalar_lea.vmem %s8, %s326
      %s328 = smul.u32 16, %s19
      %p329 = scmp.lt.s32.totalorder %s328, 63
      %s330 = scalar_select %p329, %s328, 63
      %s331 = smul.addr %s330, 8
      %s332 = scalar_lea.vmem %s0, %s331
      %s333 = smul.u32 16, %s19
      %p334 = scmp.lt.s32.totalorder %s19, 3
      %s335 = scalar_select %p334, %s19, 3
      %s336 = smul.addr %s335, 2
      %s337 = smul.addr %s336, 8
      %s338 = scalar_lea.vmem %s1, %s337
      %s339 = smul.u32 16, %s19
      %p340 = scmp.lt.s32.totalorder %s339, 63
      %s341 = scalar_select %p340, %s339, 63
      %s342 = smul.addr %s341, 8
      %s343 = scalar_lea.vmem %s2, %s342
      %s344 = smul.u32 16, %s19
      %s345 = smul.u32 16, %s19
      %p346 = scmp.lt.s32.totalorder %s345, 63
      %s347 = scalar_select %p346, %s345, 63
      %s348 = smul.addr %s347, 8
      %s349 = scalar_lea.vmem %s8, %s348
      %s350 = smul.u32 16, %s19
      %v351 = vld [vmem:[%s332] sm:$0xff]
      %v352 = vld [vmem:[%s332 + $0x8] sm:$0xff]
      %v353 = vld [vmem:[%s332 + $0x10] sm:$0xff]
      %v354 = vld [vmem:[%s332 + $0x18] sm:$0xff]
      %v355 = vld [vmem:[%s332 + $0x20] sm:$0xff]
      %v356 = vld [vmem:[%s332 + $0x28] sm:$0xff]
      %v357 = vld [vmem:[%s332 + $0x30] sm:$0xff]
      %v358 = vld [vmem:[%s332 + $0x38] sm:$0xff]
      %v359 = vld [vmem:[%s332 + $0x40] sm:$0xff]
      %v360 = vld [vmem:[%s332 + $0x48] sm:$0xff]
      %v361 = vld [vmem:[%s332 + $0x50] sm:$0xff]
      %v362 = vld [vmem:[%s332 + $0x58] sm:$0xff]
      %v363 = vld [vmem:[%s332 + $0x60] sm:$0xff]
      %v364 = vld [vmem:[%s332 + $0x68] sm:$0xff]
      %v365 = vld [vmem:[%s332 + $0x70] sm:$0xff]
      %v366 = vld [vmem:[%s332 + $0x78] sm:$0xff]
      %v367 = vld [vmem:[%s338] sm:$0xff]
      %v368 = vld [vmem:[%s338 + $0x8] sm:$0xff]
      %v369 = vld [vmem:[%s5] sm:$0x1]
      %v370 = vld [vmem:[%s5 + $0x1] sm:$0x1]
      %v371 = vld [vmem:[%s5 + $0x2] sm:$0x1]
      %v372 = vld [vmem:[%s3] sm:$0xff]
      %v373 = vld [vmem:[%s3 + $0x8] sm:$0xff]
      %vm374 = vcmask 130048
      %v376 = vsel %vm374, %v351, 0
      %v379 = vsel %vm374, %v352, 0
      %v382 = vsel %vm374, %v353, 0
      %v385 = vsel %vm374, %v354, 0
      %v388 = vsel %vm374, %v355, 0
      %v391 = vsel %vm374, %v356, 0
      %v394 = vsel %vm374, %v357, 0
      %v397 = vsel %vm374, %v358, 0
      %v400 = vsel %vm374, %v359, 0
      %v403 = vsel %vm374, %v360, 0
      %v406 = vsel %vm374, %v361, 0
      %v409 = vsel %vm374, %v362, 0
      %v412 = vsel %vm374, %v363, 0
      %v415 = vsel %vm374, %v364, 0
      %v418 = vsel %vm374, %v365, 0
      %v421 = vsel %vm374, %v366, 0
      %423 = vmatprep.subr.mxu0 0.0
      %424 = vmatpush1.msra.mxu0 0.0
      %425 = vmatprep.subr.mxu0 0.0
      %426 = vmatpush1.msra.mxu0 0.0
      %427 = vmatprep.subr.mxu0 0.0
      %428 = vmatpush1.msra.mxu0 0.0
      %429 = vmatprep.subr.mxu0 0.0
      %430 = vmatpush1.msra.mxu0 0.0
      %431 = vmatprep.subr.mxu0 0.0
      %432 = vmatpush1.msra.mxu0 0.0
      %433 = vmatprep.subr.mxu0 0.0
      %434 = vmatpush1.msra.mxu0 0.0
      %435 = vmatprep.subr.mxu0 0.0
      %436 = vmatpush1.msra.mxu0 0.0
      %437 = vmatprep.subr.mxu0 0.0
      %438 = vmatpush1.msra.mxu0 0.0
      %439 = vmatprep.subr.mxu0 0.0
      %440 = vmatpush1.msra.mxu0 0.0
      %441 = vmatprep.subr.mxu0 0.0
      %442 = vmatpush1.msra.mxu0 0.0
      %443 = vmatprep.subr.mxu0 0.0
      %444 = vmatpush1.msra.mxu0 0.0
      %445 = vmatprep.subr.mxu0 0.0
      %446 = vmatpush1.msra.mxu0 0.0
      %447 = vmatprep.subr.mxu0 0.0
      %448 = vmatpush1.msra.mxu0 0.0
      %449 = vmatprep.subr.mxu0 0.0
      %450 = vmatpush1.msra.mxu0 0.0
      %451 = vmatprep.subr.mxu0 0.0
      %452 = vmatpush1.msra.mxu0 %v373
      %453 = vmatprep.subr.mxu0 0.0
      %454 = vmatpush1.msra.mxu0 %v372
      %455 = vmatprep.subr.mxu0 0.0
      %456 = vmatpush2.msra.mxu0 0.0
      %457 = vmatprep.subr.mxu0 0.0
      %458 = vmatpush2.msra.mxu0 0.0
      %459 = vmatprep.subr.mxu0 0.0
      %460 = vmatpush2.msra.mxu0 0.0
      %461 = vmatprep.subr.mxu0 0.0
      %462 = vmatpush2.msra.mxu0 0.0
      %463 = vmatprep.subr.mxu0 0.0
      %464 = vmatpush2.msra.mxu0 0.0
      %465 = vmatprep.subr.mxu0 0.0
      %466 = vmatpush2.msra.mxu0 0.0
      %467 = vmatprep.subr.mxu0 0.0
      %468 = vmatpush2.msra.mxu0 0.0
      %469 = vmatprep.subr.mxu0 0.0
      %470 = vmatpush2.msra.mxu0 0.0
      %471 = vmatprep.subr.mxu0 0.0
      %472 = vmatpush2.msra.mxu0 0.0
      %473 = vmatprep.subr.mxu0 0.0
      %474 = vmatpush2.msra.mxu0 0.0
      %475 = vmatprep.subr.mxu0 0.0
      %476 = vmatpush2.msra.mxu0 0.0
      %477 = vmatprep.subr.mxu0 0.0
      %478 = vmatpush2.msra.mxu0 0.0
      %479 = vmatprep.subr.mxu0 0.0
      %480 = vmatpush2.msra.mxu0 0.0
      %481 = vmatprep.subr.mxu0 0.0
      %482 = vmatpush2.msra.mxu0 0.0
      %483 = vmatprep.subr.mxu0 0.0
      %484 = vmatpush2.msra.mxu0 0.0
      %485 = vmatprep.subr.mxu0 0.0
      %486 = vmatpush2.msra.mxu0 0.0
      %487 = vmatprep.mubr.f32.mxu0 0.0
      %488 = vmatmul.mubr.f32.gmra.mxu0 %v376
      %v489 = vpop.f32.mrf.mxu0
      %v490 = vadd.f32 0.0, %v489
      %v491 = vpop.f32.mrf.mxu0
      %492 = vmatprep.mubr.f32.mxu0 0.0
      %493 = vmatmul.mubr.f32.gmra.mxu0 %v379
      %v494 = vpop.f32.mrf.mxu0
      %v495 = vadd.f32 0.0, %v494
      %v496 = vpop.f32.mrf.mxu0
      %497 = vmatprep.mubr.f32.mxu0 0.0
      %498 = vmatmul.mubr.f32.gmra.mxu0 %v382
      %v499 = vpop.f32.mrf.mxu0
      %v500 = vadd.f32 0.0, %v499
      %v501 = vpop.f32.mrf.mxu0
      %502 = vmatprep.mubr.f32.mxu0 0.0
      %503 = vmatmul.mubr.f32.gmra.mxu0 %v385
      %v504 = vpop.f32.mrf.mxu0
      %v505 = vadd.f32 0.0, %v504
      %v506 = vpop.f32.mrf.mxu0
      %507 = vmatprep.mubr.f32.mxu0 0.0
      %508 = vmatmul.mubr.f32.gmra.mxu0 %v388
      %v509 = vpop.f32.mrf.mxu0
      %v510 = vadd.f32 0.0, %v509
      %v511 = vpop.f32.mrf.mxu0
      %512 = vmatprep.mubr.f32.mxu0 0.0
      %513 = vmatmul.mubr.f32.gmra.mxu0 %v391
      %v514 = vpop.f32.mrf.mxu0
      %v515 = vadd.f32 0.0, %v514
      %v516 = vpop.f32.mrf.mxu0
      %517 = vmatprep.mubr.f32.mxu0 0.0
      %518 = vmatmul.mubr.f32.gmra.mxu0 %v394
      %v519 = vpop.f32.mrf.mxu0
      %v520 = vadd.f32 0.0, %v519
      %v521 = vpop.f32.mrf.mxu0
      %522 = vmatprep.mubr.f32.mxu0 0.0
      %523 = vmatmul.mubr.f32.gmra.mxu0 %v397
      %v524 = vpop.f32.mrf.mxu0
      %v525 = vadd.f32 0.0, %v524
      %v526 = vpop.f32.mrf.mxu0
      %527 = vmatprep.mubr.f32.mxu0 0.0
      %528 = vmatmul.mubr.f32.gmra.mxu0 %v400
      %v529 = vpop.f32.mrf.mxu0
      %v530 = vadd.f32 0.0, %v529
      %v531 = vpop.f32.mrf.mxu0
      %532 = vmatprep.mubr.f32.mxu0 0.0
      %533 = vmatmul.mubr.f32.gmra.mxu0 %v403
      %v534 = vpop.f32.mrf.mxu0
      %v535 = vadd.f32 0.0, %v534
      %v536 = vpop.f32.mrf.mxu0
      %537 = vmatprep.mubr.f32.mxu0 0.0
      %538 = vmatmul.mubr.f32.gmra.mxu0 %v406
      %v539 = vpop.f32.mrf.mxu0
      %v540 = vadd.f32 0.0, %v539
      %v541 = vpop.f32.mrf.mxu0
      %542 = vmatprep.mubr.f32.mxu0 0.0
      %543 = vmatmul.mubr.f32.gmra.mxu0 %v409
      %v544 = vpop.f32.mrf.mxu0
      %v545 = vadd.f32 0.0, %v544
      %v546 = vpop.f32.mrf.mxu0
      %547 = vmatprep.mubr.f32.mxu0 0.0
      %548 = vmatmul.mubr.f32.gmra.mxu0 %v412
      %v549 = vpop.f32.mrf.mxu0
      %v550 = vadd.f32 0.0, %v549
      %v551 = vpop.f32.mrf.mxu0
      %552 = vmatprep.mubr.f32.mxu0 0.0
      %553 = vmatmul.mubr.f32.gmra.mxu0 %v415
      %v554 = vpop.f32.mrf.mxu0
      %v555 = vadd.f32 0.0, %v554
      %v556 = vpop.f32.mrf.mxu0
      %557 = vmatprep.mubr.f32.mxu0 0.0
      %558 = vmatmul.mubr.f32.gmra.mxu0 %v418
      %v559 = vpop.f32.mrf.mxu0
      %v560 = vadd.f32 0.0, %v559
      %v561 = vpop.f32.mrf.mxu0
      %562 = vmatprep.mubr.f32.mxu0 0.0
      %563 = vmatmul.mubr.f32.gmra.mxu0 %v421
      %v564 = vpop.f32.mrf.mxu0
      %v565 = vadd.f32 0.0, %v564
      %v566 = vpop.f32.mrf.mxu0
      %567 = vdwg.mxu0
      %v568 = vlaneseq
      %v569 = vshrl.u32 %v568, 7
      %v570 = vsub.s32 0, %v569
      %v571 = vrot.slane %v369, %v570
      %v572 = vadd.f32 %v490, %v571
      %v573 = vadd.f32 %v495, %v571
      %v574 = vadd.f32 %v500, %v571
      %v575 = vadd.f32 %v505, %v571
      %v576 = vadd.f32 %v510, %v571
      %v577 = vadd.f32 %v515, %v571
      %v578 = vadd.f32 %v520, %v571
      %v579 = vadd.f32 %v525, %v571
      %v580 = vadd.f32 %v530, %v571
      %v581 = vadd.f32 %v535, %v571
      %v582 = vadd.f32 %v540, %v571
      %v583 = vadd.f32 %v545, %v571
      %v584 = vadd.f32 %v550, %v571
      %v585 = vadd.f32 %v555, %v571
      %v586 = vadd.f32 %v560, %v571
      %v587 = vadd.f32 %v565, %v571
      %v589 = vsel %vm374, %v371, 0
      %591 = vmatprep.subr.mxu0 0.0
      %592 = vmatpush1.msra.mxu0 0.0
      %593 = vmatprep.subr.mxu0 0.0
      %594 = vmatpush1.msra.mxu0 0.0
      %595 = vmatprep.subr.mxu0 0.0
      %596 = vmatpush1.msra.mxu0 0.0
      %597 = vmatprep.subr.mxu0 0.0
      %598 = vmatpush1.msra.mxu0 0.0
      %599 = vmatprep.subr.mxu0 0.0
      %600 = vmatpush1.msra.mxu0 0.0
      %601 = vmatprep.subr.mxu0 0.0
      %602 = vmatpush1.msra.mxu0 0.0
      %603 = vmatprep.subr.mxu0 0.0
      %604 = vmatpush1.msra.mxu0 0.0
      %605 = vmatprep.subr.mxu0 0.0
      %606 = vmatpush1.msra.mxu0 0.0
      %607 = vmatprep.subr.mxu0 0.0
      %608 = vmatpush1.msra.mxu0 0.0
      %609 = vmatprep.subr.mxu0 0.0
      %610 = vmatpush1.msra.mxu0 0.0
      %611 = vmatprep.subr.mxu0 0.0
      %612 = vmatpush1.msra.mxu0 0.0
      %613 = vmatprep.subr.mxu0 0.0
      %614 = vmatpush1.msra.mxu0 0.0
      %615 = vmatprep.subr.mxu0 0.0
      %616 = vmatpush1.msra.mxu0 0.0
      %617 = vmatprep.subr.mxu0 0.0
      %618 = vmatpush1.msra.mxu0 0.0
      %619 = vmatprep.subr.mxu0 0.0
      %620 = vmatpush1.msra.mxu0 %v368
      %621 = vmatprep.subr.mxu0 0.0
      %622 = vmatpush1.msra.mxu0 %v367
      %623 = vmatprep.subr.mxu0 0.0
      %624 = vmatpush2.msra.mxu0 0.0
      %625 = vmatprep.subr.mxu0 0.0
      %626 = vmatpush2.msra.mxu0 0.0
      %627 = vmatprep.subr.mxu0 0.0
      %628 = vmatpush2.msra.mxu0 0.0
      %629 = vmatprep.subr.mxu0 0.0
      %630 = vmatpush2.msra.mxu0 0.0
      %631 = vmatprep.subr.mxu0 0.0
      %632 = vmatpush2.msra.mxu0 0.0
      %633 = vmatprep.subr.mxu0 0.0
      %634 = vmatpush2.msra.mxu0 0.0
      %635 = vmatprep.subr.mxu0 0.0
      %636 = vmatpush2.msra.mxu0 0.0
      %637 = vmatprep.subr.mxu0 0.0
      %638 = vmatpush2.msra.mxu0 0.0
      %639 = vmatprep.subr.mxu0 0.0
      %640 = vmatpush2.msra.mxu0 0.0
      %641 = vmatprep.subr.mxu0 0.0
      %642 = vmatpush2.msra.mxu0 0.0
      %643 = vmatprep.subr.mxu0 0.0
      %644 = vmatpush2.msra.mxu0 0.0
      %645 = vmatprep.subr.mxu0 0.0
      %646 = vmatpush2.msra.mxu0 0.0
      %647 = vmatprep.subr.mxu0 0.0
      %648 = vmatpush2.msra.mxu0 0.0
      %649 = vmatprep.subr.mxu0 0.0
      %650 = vmatpush2.msra.mxu0 0.0
      %651 = vmatprep.subr.mxu0 0.0
      %652 = vmatpush2.msra.mxu0 0.0
      %653 = vmatprep.subr.mxu0 0.0
      %654 = vmatpush2.msra.mxu0 0.0
      %655 = vmatprep.mubr.f32.mxu0 0.0
      %656 = vmatmul.mubr.f32.gmra.mxu0 %v589
      %v657 = vpop.f32.mrf.mxu0
      %v658 = vadd.f32 0.0, %v657
      %v659 = vpop.f32.mrf.mxu0
      %660 = vdwg.mxu0
      %v661 = vld [vmem:[%s343] sm:$0xff]
      %v662 = vld [vmem:[%s343 + $0x8] sm:$0xff]
      %v663 = vld [vmem:[%s343 + $0x10] sm:$0xff]
      %v664 = vld [vmem:[%s343 + $0x18] sm:$0xff]
      %v665 = vld [vmem:[%s343 + $0x20] sm:$0xff]
      %v666 = vld [vmem:[%s343 + $0x28] sm:$0xff]
      %v667 = vld [vmem:[%s343 + $0x30] sm:$0xff]
      %v668 = vld [vmem:[%s343 + $0x38] sm:$0xff]
      %v669 = vld [vmem:[%s343 + $0x40] sm:$0xff]
      %v670 = vld [vmem:[%s343 + $0x48] sm:$0xff]
      %v671 = vld [vmem:[%s343 + $0x50] sm:$0xff]
      %v672 = vld [vmem:[%s343 + $0x58] sm:$0xff]
      %v673 = vld [vmem:[%s343 + $0x60] sm:$0xff]
      %v674 = vld [vmem:[%s343 + $0x68] sm:$0xff]
      %v675 = vld [vmem:[%s343 + $0x70] sm:$0xff]
      %v676 = vld [vmem:[%s343 + $0x78] sm:$0xff]
      %v677 = vld [vmem:[%s6] sm:$0xff]
      %vm678 = vcmask 64512
      %v680 = vsel %vm678, %v661, 0
      %v683 = vsel %vm678, %v662, 0
      %v686 = vsel %vm678, %v663, 0
      %v689 = vsel %vm678, %v664, 0
      %v692 = vsel %vm678, %v665, 0
      %v695 = vsel %vm678, %v666, 0
      %v698 = vsel %vm678, %v667, 0
      %v701 = vsel %vm678, %v668, 0
      %v704 = vsel %vm678, %v669, 0
      %v707 = vsel %vm678, %v670, 0
      %v710 = vsel %vm678, %v671, 0
      %v713 = vsel %vm678, %v672, 0
      %v716 = vsel %vm678, %v673, 0
      %v719 = vsel %vm678, %v674, 0
      %v722 = vsel %vm678, %v675, 0
      %v725 = vsel %vm678, %v676, 0
      %727 = vmatprep.subr.mxu0 0.0
      %728 = vmatpush1.msra.mxu0 0.0
      %729 = vmatprep.subr.mxu0 0.0
      %730 = vmatpush1.msra.mxu0 0.0
      %731 = vmatprep.subr.mxu0 0.0
      %732 = vmatpush1.msra.mxu0 0.0
      %733 = vmatprep.subr.mxu0 0.0
      %734 = vmatpush1.msra.mxu0 0.0
      %735 = vmatprep.subr.mxu0 0.0
      %736 = vmatpush1.msra.mxu0 0.0
      %737 = vmatprep.subr.mxu0 0.0
      %738 = vmatpush1.msra.mxu0 0.0
      %739 = vmatprep.subr.mxu0 0.0
      %740 = vmatpush1.msra.mxu0 0.0
      %741 = vmatprep.subr.mxu0 0.0
      %742 = vmatpush1.msra.mxu0 0.0
      %743 = vmatprep.subr.mxu0 0.0
      %744 = vmatpush1.msra.mxu0 0.0
      %745 = vmatprep.subr.mxu0 0.0
      %746 = vmatpush1.msra.mxu0 0.0
      %747 = vmatprep.subr.mxu0 0.0
      %748 = vmatpush1.msra.mxu0 0.0
      %749 = vmatprep.subr.mxu0 0.0
      %750 = vmatpush1.msra.mxu0 0.0
      %751 = vmatprep.subr.mxu0 0.0
      %752 = vmatpush1.msra.mxu0 0.0
      %753 = vmatprep.subr.mxu0 0.0
      %754 = vmatpush1.msra.mxu0 0.0
      %755 = vmatprep.subr.mxu0 0.0
      %756 = vmatpush1.msra.mxu0 0.0
      %757 = vmatprep.subr.mxu0 0.0
      %758 = vmatpush1.msra.mxu0 %v677
      %759 = vmatprep.subr.mxu0 0.0
      %760 = vmatpush2.msra.mxu0 0.0
      %761 = vmatprep.subr.mxu0 0.0
      %762 = vmatpush2.msra.mxu0 0.0
      %763 = vmatprep.subr.mxu0 0.0
      %764 = vmatpush2.msra.mxu0 0.0
      %765 = vmatprep.subr.mxu0 0.0
      %766 = vmatpush2.msra.mxu0 0.0
      %767 = vmatprep.subr.mxu0 0.0
      %768 = vmatpush2.msra.mxu0 0.0
      %769 = vmatprep.subr.mxu0 0.0
      %770 = vmatpush2.msra.mxu0 0.0
      %771 = vmatprep.subr.mxu0 0.0
      %772 = vmatpush2.msra.mxu0 0.0
      %773 = vmatprep.subr.mxu0 0.0
      %774 = vmatpush2.msra.mxu0 0.0
      %775 = vmatprep.subr.mxu0 0.0
      %776 = vmatpush2.msra.mxu0 0.0
      %777 = vmatprep.subr.mxu0 0.0
      %778 = vmatpush2.msra.mxu0 0.0
      %779 = vmatprep.subr.mxu0 0.0
      %780 = vmatpush2.msra.mxu0 0.0
      %781 = vmatprep.subr.mxu0 0.0
      %782 = vmatpush2.msra.mxu0 0.0
      %783 = vmatprep.subr.mxu0 0.0
      %784 = vmatpush2.msra.mxu0 0.0
      %785 = vmatprep.subr.mxu0 0.0
      %786 = vmatpush2.msra.mxu0 0.0
      %787 = vmatprep.subr.mxu0 0.0
      %788 = vmatpush2.msra.mxu0 0.0
      %789 = vmatprep.subr.mxu0 0.0
      %790 = vmatpush2.msra.mxu0 0.0
      %791 = vmatprep.mubr.f32.mxu0 0.0
      %792 = vmatmul.mubr.f32.gmra.mxu0 %v680
      %v793 = vpop.f32.mrf.mxu0
      %v794 = vadd.f32 0.0, %v793
      %v795 = vpop.f32.mrf.mxu0
      %796 = vmatprep.mubr.f32.mxu0 0.0
      %797 = vmatmul.mubr.f32.gmra.mxu0 %v683
      %v798 = vpop.f32.mrf.mxu0
      %v799 = vadd.f32 0.0, %v798
      %v800 = vpop.f32.mrf.mxu0
      %801 = vmatprep.mubr.f32.mxu0 0.0
      %802 = vmatmul.mubr.f32.gmra.mxu0 %v686
      %v803 = vpop.f32.mrf.mxu0
      %v804 = vadd.f32 0.0, %v803
      %v805 = vpop.f32.mrf.mxu0
      %806 = vmatprep.mubr.f32.mxu0 0.0
      %807 = vmatmul.mubr.f32.gmra.mxu0 %v689
      %v808 = vpop.f32.mrf.mxu0
      %v809 = vadd.f32 0.0, %v808
      %v810 = vpop.f32.mrf.mxu0
      %811 = vmatprep.mubr.f32.mxu0 0.0
      %812 = vmatmul.mubr.f32.gmra.mxu0 %v692
      %v813 = vpop.f32.mrf.mxu0
      %v814 = vadd.f32 0.0, %v813
      %v815 = vpop.f32.mrf.mxu0
      %816 = vmatprep.mubr.f32.mxu0 0.0
      %817 = vmatmul.mubr.f32.gmra.mxu0 %v695
      %v818 = vpop.f32.mrf.mxu0
      %v819 = vadd.f32 0.0, %v818
      %v820 = vpop.f32.mrf.mxu0
      %821 = vmatprep.mubr.f32.mxu0 0.0
      %822 = vmatmul.mubr.f32.gmra.mxu0 %v698
      %v823 = vpop.f32.mrf.mxu0
      %v824 = vadd.f32 0.0, %v823
      %v825 = vpop.f32.mrf.mxu0
      %826 = vmatprep.mubr.f32.mxu0 0.0
      %827 = vmatmul.mubr.f32.gmra.mxu0 %v701
      %v828 = vpop.f32.mrf.mxu0
      %v829 = vadd.f32 0.0, %v828
      %v830 = vpop.f32.mrf.mxu0
      %831 = vmatprep.mubr.f32.mxu0 0.0
      %832 = vmatmul.mubr.f32.gmra.mxu0 %v704
      %v833 = vpop.f32.mrf.mxu0
      %v834 = vadd.f32 0.0, %v833
      %v835 = vpop.f32.mrf.mxu0
      %836 = vmatprep.mubr.f32.mxu0 0.0
      %837 = vmatmul.mubr.f32.gmra.mxu0 %v707
      %v838 = vpop.f32.mrf.mxu0
      %v839 = vadd.f32 0.0, %v838
      %v840 = vpop.f32.mrf.mxu0
      %841 = vmatprep.mubr.f32.mxu0 0.0
      %842 = vmatmul.mubr.f32.gmra.mxu0 %v710
      %v843 = vpop.f32.mrf.mxu0
      %v844 = vadd.f32 0.0, %v843
      %v845 = vpop.f32.mrf.mxu0
      %846 = vmatprep.mubr.f32.mxu0 0.0
      %847 = vmatmul.mubr.f32.gmra.mxu0 %v713
      %v848 = vpop.f32.mrf.mxu0
      %v849 = vadd.f32 0.0, %v848
      %v850 = vpop.f32.mrf.mxu0
      %851 = vmatprep.mubr.f32.mxu0 0.0
      %852 = vmatmul.mubr.f32.gmra.mxu0 %v716
      %v853 = vpop.f32.mrf.mxu0
      %v854 = vadd.f32 0.0, %v853
      %v855 = vpop.f32.mrf.mxu0
      %856 = vmatprep.mubr.f32.mxu0 0.0
      %857 = vmatmul.mubr.f32.gmra.mxu0 %v719
      %v858 = vpop.f32.mrf.mxu0
      %v859 = vadd.f32 0.0, %v858
      %v860 = vpop.f32.mrf.mxu0
      %861 = vmatprep.mubr.f32.mxu0 0.0
      %862 = vmatmul.mubr.f32.gmra.mxu0 %v722
      %v863 = vpop.f32.mrf.mxu0
      %v864 = vadd.f32 0.0, %v863
      %v865 = vpop.f32.mrf.mxu0
      %866 = vmatprep.mubr.f32.mxu0 0.0
      %867 = vmatmul.mubr.f32.gmra.mxu0 %v725
      %v868 = vpop.f32.mrf.mxu0
      %v869 = vadd.f32 0.0, %v868
      %v870 = vpop.f32.mrf.mxu0
      %871 = vdwg.mxu0
      %v872 = vld [vmem:[%s7] sm:$0xff]
      %v873 = vld [vmem:[%s7 + $0x8] sm:$0xff]
      %v874 = vld [vmem:[%s7 + $0x10] sm:$0xff]
      %v875 = vld [vmem:[%s7 + $0x18] sm:$0xff]
      %v876 = vld [vmem:[%s7 + $0x20] sm:$0xff]
      %v877 = vld [vmem:[%s7 + $0x28] sm:$0xff]
      %v878 = vld [vmem:[%s7 + $0x30] sm:$0xff]
      %v879 = vld [vmem:[%s7 + $0x38] sm:$0xff]
      %v880 = vld [vmem:[%s7 + $0x40] sm:$0xff]
      %v881 = vld [vmem:[%s7 + $0x48] sm:$0xff]
      %v882 = vld [vmem:[%s7 + $0x50] sm:$0xff]
      %v883 = vld [vmem:[%s7 + $0x58] sm:$0xff]
      %v884 = vld [vmem:[%s7 + $0x60] sm:$0xff]
      %v885 = vld [vmem:[%s7 + $0x68] sm:$0xff]
      %v886 = vld [vmem:[%s7 + $0x70] sm:$0xff]
      %v887 = vld [vmem:[%s7 + $0x78] sm:$0xff]
      %v888 = vmul.f32 %v794, %v872
      %v889 = vmul.f32 %v799, %v873
      %v890 = vmul.f32 %v804, %v874
      %v891 = vmul.f32 %v809, %v875
      %v892 = vmul.f32 %v814, %v876
      %v893 = vmul.f32 %v819, %v877
      %v894 = vmul.f32 %v824, %v878
      %v895 = vmul.f32 %v829, %v879
      %v896 = vmul.f32 %v834, %v880
      %v897 = vmul.f32 %v839, %v881
      %v898 = vmul.f32 %v844, %v882
      %v899 = vmul.f32 %v849, %v883
      %v900 = vmul.f32 %v854, %v884
      %v901 = vmul.f32 %v859, %v885
      %v902 = vmul.f32 %v864, %v886
      %v903 = vmul.f32 %v869, %v887
      %905 = vset.pattern.permute.xlu0 64
      %906 = vperm.xlu0 %905, %v490
      %v907 = vpop.permute.xlu0 %906
      %910 = vset.pattern.permute.xlu0 64
      %911 = vperm.xlu0 %910, %v495
      %v912 = vpop.permute.xlu0 %911
      %915 = vset.pattern.permute.xlu0 64
      %916 = vperm.xlu0 %915, %v500
      %v917 = vpop.permute.xlu0 %916
      %920 = vset.pattern.permute.xlu0 64
      %921 = vperm.xlu0 %920, %v505
      %v922 = vpop.permute.xlu0 %921
      %925 = vset.pattern.permute.xlu0 64
      %926 = vperm.xlu0 %925, %v510
      %v927 = vpop.permute.xlu0 %926
      %930 = vset.pattern.permute.xlu0 64
      %931 = vperm.xlu0 %930, %v515
      %v932 = vpop.permute.xlu0 %931
      %935 = vset.pattern.permute.xlu0 64
      %936 = vperm.xlu0 %935, %v520
      %v937 = vpop.permute.xlu0 %936
      %940 = vset.pattern.permute.xlu0 64
      %941 = vperm.xlu0 %940, %v525
      %v942 = vpop.permute.xlu0 %941
      %945 = vset.pattern.permute.xlu0 64
      %946 = vperm.xlu0 %945, %v530
      %v947 = vpop.permute.xlu0 %946
      %950 = vset.pattern.permute.xlu0 64
      %951 = vperm.xlu0 %950, %v535
      %v952 = vpop.permute.xlu0 %951
      %955 = vset.pattern.permute.xlu0 64
      %956 = vperm.xlu0 %955, %v540
      %v957 = vpop.permute.xlu0 %956
      %960 = vset.pattern.permute.xlu0 64
      %961 = vperm.xlu0 %960, %v545
      %v962 = vpop.permute.xlu0 %961
      %965 = vset.pattern.permute.xlu0 64
      %966 = vperm.xlu0 %965, %v550
      %v967 = vpop.permute.xlu0 %966
      %970 = vset.pattern.permute.xlu0 64
      %971 = vperm.xlu0 %970, %v555
      %v972 = vpop.permute.xlu0 %971
      %975 = vset.pattern.permute.xlu0 64
      %976 = vperm.xlu0 %975, %v560
      %v977 = vpop.permute.xlu0 %976
      %980 = vset.pattern.permute.xlu0 64
      %981 = vperm.xlu0 %980, %v565
      %v982 = vpop.permute.xlu0 %981
      %v984 = vlaneseq
      %v985 = vshrl.u32 %v984, 7
      %v986 = vsub.s32 0, %v985
      %v987 = vrot.slane %v658, %v986
      %v988 = vadd.f32 %v907, %v987
      %v989 = vadd.f32 %v912, %v987
      %v990 = vadd.f32 %v917, %v987
      %v991 = vadd.f32 %v922, %v987
      %v992 = vadd.f32 %v927, %v987
      %v993 = vadd.f32 %v932, %v987
      %v994 = vadd.f32 %v937, %v987
      %v995 = vadd.f32 %v942, %v987
      %v996 = vadd.f32 %v947, %v987
      %v997 = vadd.f32 %v952, %v987
      %v998 = vadd.f32 %v957, %v987
      %v999 = vadd.f32 %v962, %v987
      %v1000 = vadd.f32 %v967, %v987
      %v1001 = vadd.f32 %v972, %v987
      %v1002 = vadd.f32 %v977, %v987
      %v1003 = vadd.f32 %v982, %v987
      %vm1004 = vcmp.ge.f32.partialorder %v988, 0.0
      %vm1005 = vcmp.ge.f32.partialorder %v989, 0.0
      %vm1006 = vcmp.ge.f32.partialorder %v990, 0.0
      %vm1007 = vcmp.ge.f32.partialorder %v991, 0.0
      %vm1008 = vcmp.ge.f32.partialorder %v992, 0.0
      %vm1009 = vcmp.ge.f32.partialorder %v993, 0.0
      %vm1010 = vcmp.ge.f32.partialorder %v994, 0.0
      %vm1011 = vcmp.ge.f32.partialorder %v995, 0.0
      %vm1012 = vcmp.ge.f32.partialorder %v996, 0.0
      %vm1013 = vcmp.ge.f32.partialorder %v997, 0.0
      %vm1014 = vcmp.ge.f32.partialorder %v998, 0.0
      %vm1015 = vcmp.ge.f32.partialorder %v999, 0.0
      %vm1016 = vcmp.ge.f32.partialorder %v1000, 0.0
      %vm1017 = vcmp.ge.f32.partialorder %v1001, 0.0
      %vm1018 = vcmp.ge.f32.partialorder %v1002, 0.0
      %vm1019 = vcmp.ge.f32.partialorder %v1003, 0.0
      %v1020 = vmul.f32 %v988, 0.2
      %v1021 = vmul.f32 %v989, 0.2
      %v1022 = vmul.f32 %v990, 0.2
      %v1023 = vmul.f32 %v991, 0.2
      %v1024 = vmul.f32 %v992, 0.2
      %v1025 = vmul.f32 %v993, 0.2
      %v1026 = vmul.f32 %v994, 0.2
      %v1027 = vmul.f32 %v995, 0.2
      %v1028 = vmul.f32 %v996, 0.2
      %v1029 = vmul.f32 %v997, 0.2
      %v1030 = vmul.f32 %v998, 0.2
      %v1031 = vmul.f32 %v999, 0.2
      %v1032 = vmul.f32 %v1000, 0.2
      %v1033 = vmul.f32 %v1001, 0.2
      %v1034 = vmul.f32 %v1002, 0.2
      %v1035 = vmul.f32 %v1003, 0.2
      %v1036 = vsel %vm1004, %v988, %v1020
      %v1037 = vsel %vm1005, %v989, %v1021
      %v1038 = vsel %vm1006, %v990, %v1022
      %v1039 = vsel %vm1007, %v991, %v1023
      %v1040 = vsel %vm1008, %v992, %v1024
      %v1041 = vsel %vm1009, %v993, %v1025
      %v1042 = vsel %vm1010, %v994, %v1026
      %v1043 = vsel %vm1011, %v995, %v1027
      %v1044 = vsel %vm1012, %v996, %v1028
      %v1045 = vsel %vm1013, %v997, %v1029
      %v1046 = vsel %vm1014, %v998, %v1030
      %v1047 = vsel %vm1015, %v999, %v1031
      %v1048 = vsel %vm1016, %v1000, %v1032
      %v1049 = vsel %vm1017, %v1001, %v1033
      %v1050 = vsel %vm1018, %v1002, %v1034
      %v1051 = vsel %vm1019, %v1003, %v1035
      %vm1052 = vcmp.gt.f32.partialorder %v888, 0.0
      %vm1053 = vcmp.gt.f32.partialorder %v889, 0.0
      %vm1054 = vcmp.gt.f32.partialorder %v890, 0.0
      %vm1055 = vcmp.gt.f32.partialorder %v891, 0.0
      %vm1056 = vcmp.gt.f32.partialorder %v892, 0.0
      %vm1057 = vcmp.gt.f32.partialorder %v893, 0.0
      %vm1058 = vcmp.gt.f32.partialorder %v894, 0.0
      %vm1059 = vcmp.gt.f32.partialorder %v895, 0.0
      %vm1060 = vcmp.gt.f32.partialorder %v896, 0.0
      %vm1061 = vcmp.gt.f32.partialorder %v897, 0.0
      %vm1062 = vcmp.gt.f32.partialorder %v898, 0.0
      %vm1063 = vcmp.gt.f32.partialorder %v899, 0.0
      %vm1064 = vcmp.gt.f32.partialorder %v900, 0.0
      %vm1065 = vcmp.gt.f32.partialorder %v901, 0.0
      %vm1066 = vcmp.gt.f32.partialorder %v902, 0.0
      %vm1067 = vcmp.gt.f32.partialorder %v903, 0.0
      %v1068 = vsel %vm1052, %v1036, -9e+15
      %v1069 = vsel %vm1053, %v1037, -9e+15
      %v1070 = vsel %vm1054, %v1038, -9e+15
      %v1071 = vsel %vm1055, %v1039, -9e+15
      %v1072 = vsel %vm1056, %v1040, -9e+15
      %v1073 = vsel %vm1057, %v1041, -9e+15
      %v1074 = vsel %vm1058, %v1042, -9e+15
      %v1075 = vsel %vm1059, %v1043, -9e+15
      %v1076 = vsel %vm1060, %v1044, -9e+15
      %v1077 = vsel %vm1061, %v1045, -9e+15
      %v1078 = vsel %vm1062, %v1046, -9e+15
      %v1079 = vsel %vm1063, %v1047, -9e+15
      %v1080 = vsel %vm1064, %v1048, -9e+15
      %v1081 = vsel %vm1065, %v1049, -9e+15
      %v1082 = vsel %vm1066, %v1050, -9e+15
      %v1083 = vsel %vm1067, %v1051, -9e+15
      %1084 = vmax.xlane.f32.xlu0 %v1068
      %v1085 = vpop.xlane.xlu0 %1084
      %1086 = vmax.xlane.f32.xlu0 %v1069
      %v1087 = vpop.xlane.xlu0 %1086
      %1088 = vmax.xlane.f32.xlu0 %v1070
      %v1089 = vpop.xlane.xlu0 %1088
      %1090 = vmax.xlane.f32.xlu0 %v1071
      %v1091 = vpop.xlane.xlu0 %1090
      %1092 = vmax.xlane.f32.xlu0 %v1072
      %v1093 = vpop.xlane.xlu0 %1092
      %1094 = vmax.xlane.f32.xlu0 %v1073
      %v1095 = vpop.xlane.xlu0 %1094
      %1096 = vmax.xlane.f32.xlu0 %v1074
      %v1097 = vpop.xlane.xlu0 %1096
      %1098 = vmax.xlane.f32.xlu0 %v1075
      %v1099 = vpop.xlane.xlu0 %1098
      %1100 = vmax.xlane.f32.xlu0 %v1076
      %v1101 = vpop.xlane.xlu0 %1100
      %1102 = vmax.xlane.f32.xlu0 %v1077
      %v1103 = vpop.xlane.xlu0 %1102
      %1104 = vmax.xlane.f32.xlu0 %v1078
      %v1105 = vpop.xlane.xlu0 %1104
      %1106 = vmax.xlane.f32.xlu0 %v1079
      %v1107 = vpop.xlane.xlu0 %1106
      %1108 = vmax.xlane.f32.xlu0 %v1080
      %v1109 = vpop.xlane.xlu0 %1108
      %1110 = vmax.xlane.f32.xlu0 %v1081
      %v1111 = vpop.xlane.xlu0 %1110
      %1112 = vmax.xlane.f32.xlu0 %v1082
      %v1113 = vpop.xlane.xlu0 %1112
      %1114 = vmax.xlane.f32.xlu0 %v1083
      %v1115 = vpop.xlane.xlu0 %1114
      %v1116 = vsub.f32 %v1068, %v1085
      %v1117 = vsub.f32 %v1069, %v1087
      %v1118 = vsub.f32 %v1070, %v1089
      %v1119 = vsub.f32 %v1071, %v1091
      %v1120 = vsub.f32 %v1072, %v1093
      %v1121 = vsub.f32 %v1073, %v1095
      %v1122 = vsub.f32 %v1074, %v1097
      %v1123 = vsub.f32 %v1075, %v1099
      %v1124 = vsub.f32 %v1076, %v1101
      %v1125 = vsub.f32 %v1077, %v1103
      %v1126 = vsub.f32 %v1078, %v1105
      %v1127 = vsub.f32 %v1079, %v1107
      %v1128 = vsub.f32 %v1080, %v1109
      %v1129 = vsub.f32 %v1081, %v1111
      %v1130 = vsub.f32 %v1082, %v1113
      %v1131 = vsub.f32 %v1083, %v1115
      %v1132 = vmul.f32 %v1116, 1.442695
      %v1133 = vpow.pop %v1132
      %v1134 = vmul.f32 %v1117, 1.442695
      %v1135 = vpow.pop %v1134
      %v1136 = vmul.f32 %v1118, 1.442695
      %v1137 = vpow.pop %v1136
      %v1138 = vmul.f32 %v1119, 1.442695
      %v1139 = vpow.pop %v1138
      %v1140 = vmul.f32 %v1120, 1.442695
      %v1141 = vpow.pop %v1140
      %v1142 = vmul.f32 %v1121, 1.442695
      %v1143 = vpow.pop %v1142
      %v1144 = vmul.f32 %v1122, 1.442695
      %v1145 = vpow.pop %v1144
      %v1146 = vmul.f32 %v1123, 1.442695
      %v1147 = vpow.pop %v1146
      %v1148 = vmul.f32 %v1124, 1.442695
      %v1149 = vpow.pop %v1148
      %v1150 = vmul.f32 %v1125, 1.442695
      %v1151 = vpow.pop %v1150
      %v1152 = vmul.f32 %v1126, 1.442695
      %v1153 = vpow.pop %v1152
      %v1154 = vmul.f32 %v1127, 1.442695
      %v1155 = vpow.pop %v1154
      %v1156 = vmul.f32 %v1128, 1.442695
      %v1157 = vpow.pop %v1156
      %v1158 = vmul.f32 %v1129, 1.442695
      %v1159 = vpow.pop %v1158
      %v1160 = vmul.f32 %v1130, 1.442695
      %v1161 = vpow.pop %v1160
      %v1162 = vmul.f32 %v1131, 1.442695
      %v1163 = vpow.pop %v1162
      %1164 = vadd.xlane.f32.xlu0 %v1133
      %v1165 = vpop.xlane.xlu0 %1164
      %1166 = vadd.xlane.f32.xlu0 %v1135
      %v1167 = vpop.xlane.xlu0 %1166
      %1168 = vadd.xlane.f32.xlu0 %v1137
      %v1169 = vpop.xlane.xlu0 %1168
      %1170 = vadd.xlane.f32.xlu0 %v1139
      %v1171 = vpop.xlane.xlu0 %1170
      %1172 = vadd.xlane.f32.xlu0 %v1141
      %v1173 = vpop.xlane.xlu0 %1172
      %1174 = vadd.xlane.f32.xlu0 %v1143
      %v1175 = vpop.xlane.xlu0 %1174
      %1176 = vadd.xlane.f32.xlu0 %v1145
      %v1177 = vpop.xlane.xlu0 %1176
      %1178 = vadd.xlane.f32.xlu0 %v1147
      %v1179 = vpop.xlane.xlu0 %1178
      %1180 = vadd.xlane.f32.xlu0 %v1149
      %v1181 = vpop.xlane.xlu0 %1180
      %1182 = vadd.xlane.f32.xlu0 %v1151
      %v1183 = vpop.xlane.xlu0 %1182
      %1184 = vadd.xlane.f32.xlu0 %v1153
      %v1185 = vpop.xlane.xlu0 %1184
      %1186 = vadd.xlane.f32.xlu0 %v1155
      %v1187 = vpop.xlane.xlu0 %1186
      %1188 = vadd.xlane.f32.xlu0 %v1157
      %v1189 = vpop.xlane.xlu0 %1188
      %1190 = vadd.xlane.f32.xlu0 %v1159
      %v1191 = vpop.xlane.xlu0 %1190
      %1192 = vadd.xlane.f32.xlu0 %v1161
      %v1193 = vpop.xlane.xlu0 %1192
      %1194 = vadd.xlane.f32.xlu0 %v1163
      %v1195 = vpop.xlane.xlu0 %1194
      %1196 = vrot.lane.b32.xlu0 %v490, 96
      %v1197 = vpop.permute.xlu0 %1196
      %1198 = vrot.lane.b32.xlu0 %v495, 96
      %v1199 = vpop.permute.xlu0 %1198
      %1200 = vrot.lane.b32.xlu0 %v500, 96
      %v1201 = vpop.permute.xlu0 %1200
      %1202 = vrot.lane.b32.xlu0 %v505, 96
      %v1203 = vpop.permute.xlu0 %1202
      %1204 = vrot.lane.b32.xlu0 %v510, 96
      %v1205 = vpop.permute.xlu0 %1204
      %1206 = vrot.lane.b32.xlu0 %v515, 96
      %v1207 = vpop.permute.xlu0 %1206
      %1208 = vrot.lane.b32.xlu0 %v520, 96
      %v1209 = vpop.permute.xlu0 %1208
      %1210 = vrot.lane.b32.xlu0 %v525, 96
      %v1211 = vpop.permute.xlu0 %1210
      %1212 = vrot.lane.b32.xlu0 %v530, 96
      %v1213 = vpop.permute.xlu0 %1212
      %1214 = vrot.lane.b32.xlu0 %v535, 96
      %v1215 = vpop.permute.xlu0 %1214
      %1216 = vrot.lane.b32.xlu0 %v540, 96
      %v1217 = vpop.permute.xlu0 %1216
      %1218 = vrot.lane.b32.xlu0 %v545, 96
      %v1219 = vpop.permute.xlu0 %1218
      %1220 = vrot.lane.b32.xlu0 %v550, 96
      %v1221 = vpop.permute.xlu0 %1220
      %1222 = vrot.lane.b32.xlu0 %v555, 96
      %v1223 = vpop.permute.xlu0 %1222
      %1224 = vrot.lane.b32.xlu0 %v560, 96
      %v1225 = vpop.permute.xlu0 %1224
      %1226 = vrot.lane.b32.xlu0 %v565, 96
      %v1227 = vpop.permute.xlu0 %1226
      %1244 = vmatprep.subr.mxu0 0.0
      %1245 = vmatpush1.msra.mxu0 %v1227
      %1246 = vmatprep.subr.mxu0 0.0
      %1247 = vmatpush1.msra.mxu0 %v1225
      %1248 = vmatprep.subr.mxu0 0.0
      %1249 = vmatpush1.msra.mxu0 %v1223
      %1250 = vmatprep.subr.mxu0 0.0
      %1251 = vmatpush1.msra.mxu0 %v1221
      %1252 = vmatprep.subr.mxu0 0.0
      %1253 = vmatpush1.msra.mxu0 %v1219
      %1254 = vmatprep.subr.mxu0 0.0
      %1255 = vmatpush1.msra.mxu0 %v1217
      %1256 = vmatprep.subr.mxu0 0.0
      %1257 = vmatpush1.msra.mxu0 %v1215
      %1258 = vmatprep.subr.mxu0 0.0
      %1259 = vmatpush1.msra.mxu0 %v1213
      %1260 = vmatprep.subr.mxu0 0.0
      %1261 = vmatpush1.msra.mxu0 %v1211
      %1262 = vmatprep.subr.mxu0 0.0
      %1263 = vmatpush1.msra.mxu0 %v1209
      %1264 = vmatprep.subr.mxu0 0.0
      %1265 = vmatpush1.msra.mxu0 %v1207
      %1266 = vmatprep.subr.mxu0 0.0
      %1267 = vmatpush1.msra.mxu0 %v1205
      %1268 = vmatprep.subr.mxu0 0.0
      %1269 = vmatpush1.msra.mxu0 %v1203
      %1270 = vmatprep.subr.mxu0 0.0
      %1271 = vmatpush1.msra.mxu0 %v1201
      %1272 = vmatprep.subr.mxu0 0.0
      %1273 = vmatpush1.msra.mxu0 %v1199
      %1274 = vmatprep.subr.mxu0 0.0
      %1275 = vmatpush1.msra.mxu0 %v1197
      %1276 = vmatprep.subr.mxu0 0.0
      %1277 = vmatpush2.msra.mxu0 0.0
      %1278 = vmatprep.subr.mxu0 0.0
      %1279 = vmatpush2.msra.mxu0 0.0
      %1280 = vmatprep.subr.mxu0 0.0
      %1281 = vmatpush2.msra.mxu0 0.0
      %1282 = vmatprep.subr.mxu0 0.0
      %1283 = vmatpush2.msra.mxu0 0.0
      %1284 = vmatprep.subr.mxu0 0.0
      %1285 = vmatpush2.msra.mxu0 0.0
      %1286 = vmatprep.subr.mxu0 0.0
      %1287 = vmatpush2.msra.mxu0 0.0
      %1288 = vmatprep.subr.mxu0 0.0
      %1289 = vmatpush2.msra.mxu0 0.0
      %1290 = vmatprep.subr.mxu0 0.0
      %1291 = vmatpush2.msra.mxu0 0.0
      %1292 = vmatprep.subr.mxu0 0.0
      %1293 = vmatpush2.msra.mxu0 0.0
      %1294 = vmatprep.subr.mxu0 0.0
      %1295 = vmatpush2.msra.mxu0 0.0
      %1296 = vmatprep.subr.mxu0 0.0
      %1297 = vmatpush2.msra.mxu0 0.0
      %1298 = vmatprep.subr.mxu0 0.0
      %1299 = vmatpush2.msra.mxu0 0.0
      %1300 = vmatprep.subr.mxu0 0.0
      %1301 = vmatpush2.msra.mxu0 0.0
      %1302 = vmatprep.subr.mxu0 0.0
      %1303 = vmatpush2.msra.mxu0 0.0
      %1304 = vmatprep.subr.mxu0 0.0
      %1305 = vmatpush2.msra.mxu0 0.0
      %1306 = vmatprep.subr.mxu0 0.0
      %1307 = vmatpush2.msra.mxu0 0.0
      %1308 = vmatprep.mubr.f32.mxu0 0.0
      %1309 = vmatmul.mubr.f32.gmra.mxu0 %v1133
      %v1310 = vpop.f32.mrf.mxu0
      %v1311 = vadd.f32 0.0, %v1310
      %v1312 = vpop.f32.mrf.mxu0
      %1313 = vmatprep.mubr.f32.mxu0 0.0
      %1314 = vmatmul.mubr.f32.gmra.mxu0 %v1135
      %v1315 = vpop.f32.mrf.mxu0
      %v1316 = vadd.f32 0.0, %v1315
      %v1317 = vpop.f32.mrf.mxu0
      %1318 = vmatprep.mubr.f32.mxu0 0.0
      %1319 = vmatmul.mubr.f32.gmra.mxu0 %v1137
      %v1320 = vpop.f32.mrf.mxu0
      %v1321 = vadd.f32 0.0, %v1320
      %v1322 = vpop.f32.mrf.mxu0
      %1323 = vmatprep.mubr.f32.mxu0 0.0
      %1324 = vmatmul.mubr.f32.gmra.mxu0 %v1139
      %v1325 = vpop.f32.mrf.mxu0
      %v1326 = vadd.f32 0.0, %v1325
      %v1327 = vpop.f32.mrf.mxu0
      %1328 = vmatprep.mubr.f32.mxu0 0.0
      %1329 = vmatmul.mubr.f32.gmra.mxu0 %v1141
      %v1330 = vpop.f32.mrf.mxu0
      %v1331 = vadd.f32 0.0, %v1330
      %v1332 = vpop.f32.mrf.mxu0
      %1333 = vmatprep.mubr.f32.mxu0 0.0
      %1334 = vmatmul.mubr.f32.gmra.mxu0 %v1143
      %v1335 = vpop.f32.mrf.mxu0
      %v1336 = vadd.f32 0.0, %v1335
      %v1337 = vpop.f32.mrf.mxu0
      %1338 = vmatprep.mubr.f32.mxu0 0.0
      %1339 = vmatmul.mubr.f32.gmra.mxu0 %v1145
      %v1340 = vpop.f32.mrf.mxu0
      %v1341 = vadd.f32 0.0, %v1340
      %v1342 = vpop.f32.mrf.mxu0
      %1343 = vmatprep.mubr.f32.mxu0 0.0
      %1344 = vmatmul.mubr.f32.gmra.mxu0 %v1147
      %v1345 = vpop.f32.mrf.mxu0
      %v1346 = vadd.f32 0.0, %v1345
      %v1347 = vpop.f32.mrf.mxu0
      %1348 = vmatprep.mubr.f32.mxu0 0.0
      %1349 = vmatmul.mubr.f32.gmra.mxu0 %v1149
      %v1350 = vpop.f32.mrf.mxu0
      %v1351 = vadd.f32 0.0, %v1350
      %v1352 = vpop.f32.mrf.mxu0
      %1353 = vmatprep.mubr.f32.mxu0 0.0
      %1354 = vmatmul.mubr.f32.gmra.mxu0 %v1151
      %v1355 = vpop.f32.mrf.mxu0
      %v1356 = vadd.f32 0.0, %v1355
      %v1357 = vpop.f32.mrf.mxu0
      %1358 = vmatprep.mubr.f32.mxu0 0.0
      %1359 = vmatmul.mubr.f32.gmra.mxu0 %v1153
      %v1360 = vpop.f32.mrf.mxu0
      %v1361 = vadd.f32 0.0, %v1360
      %v1362 = vpop.f32.mrf.mxu0
      %1363 = vmatprep.mubr.f32.mxu0 0.0
      %1364 = vmatmul.mubr.f32.gmra.mxu0 %v1155
      %v1365 = vpop.f32.mrf.mxu0
      %v1366 = vadd.f32 0.0, %v1365
      %v1367 = vpop.f32.mrf.mxu0
      %1368 = vmatprep.mubr.f32.mxu0 0.0
      %1369 = vmatmul.mubr.f32.gmra.mxu0 %v1157
      %v1370 = vpop.f32.mrf.mxu0
      %v1371 = vadd.f32 0.0, %v1370
      %v1372 = vpop.f32.mrf.mxu0
      %1373 = vmatprep.mubr.f32.mxu0 0.0
      %1374 = vmatmul.mubr.f32.gmra.mxu0 %v1159
      %v1375 = vpop.f32.mrf.mxu0
      %v1376 = vadd.f32 0.0, %v1375
      %v1377 = vpop.f32.mrf.mxu0
      %1378 = vmatprep.mubr.f32.mxu0 0.0
      %1379 = vmatmul.mubr.f32.gmra.mxu0 %v1161
      %v1380 = vpop.f32.mrf.mxu0
      %v1381 = vadd.f32 0.0, %v1380
      %v1382 = vpop.f32.mrf.mxu0
      %1383 = vmatprep.mubr.f32.mxu0 0.0
      %1384 = vmatmul.mubr.f32.gmra.mxu0 %v1163
      %v1385 = vpop.f32.mrf.mxu0
      %v1386 = vadd.f32 0.0, %v1385
      %v1387 = vpop.f32.mrf.mxu0
      %1388 = vdwg.mxu0
      %v1389 = vrcp.pop %v1165
      %v1390 = vrcp.pop %v1167
      %v1391 = vrcp.pop %v1169
      %v1392 = vrcp.pop %v1171
      %v1393 = vrcp.pop %v1173
      %v1394 = vrcp.pop %v1175
      %v1395 = vrcp.pop %v1177
      %v1396 = vrcp.pop %v1179
      %v1397 = vrcp.pop %v1181
      %v1398 = vrcp.pop %v1183
      %v1399 = vrcp.pop %v1185
      %v1400 = vrcp.pop %v1187
      %v1401 = vrcp.pop %v1189
      %v1402 = vrcp.pop %v1191
      %v1403 = vrcp.pop %v1193
      %v1404 = vrcp.pop %v1195
      %v1405 = vmul.f32 %v1311, %v1389
      %v1406 = vmul.f32 %v1316, %v1390
      %v1407 = vmul.f32 %v1321, %v1391
      %v1408 = vmul.f32 %v1326, %v1392
      %v1409 = vmul.f32 %v1331, %v1393
      %v1410 = vmul.f32 %v1336, %v1394
      %v1411 = vmul.f32 %v1341, %v1395
      %v1412 = vmul.f32 %v1346, %v1396
      %v1413 = vmul.f32 %v1351, %v1397
      %v1414 = vmul.f32 %v1356, %v1398
      %v1415 = vmul.f32 %v1361, %v1399
      %v1416 = vmul.f32 %v1366, %v1400
      %v1417 = vmul.f32 %v1371, %v1401
      %v1418 = vmul.f32 %v1376, %v1402
      %v1419 = vmul.f32 %v1381, %v1403
      %v1420 = vmul.f32 %v1386, %v1404
      %vm1421 = vcmp.gt.f32.partialorder %v1405, 0.0
      %vm1422 = vcmp.gt.f32.partialorder %v1406, 0.0
      %vm1423 = vcmp.gt.f32.partialorder %v1407, 0.0
      %vm1424 = vcmp.gt.f32.partialorder %v1408, 0.0
      %vm1425 = vcmp.gt.f32.partialorder %v1409, 0.0
      %vm1426 = vcmp.gt.f32.partialorder %v1410, 0.0
      %vm1427 = vcmp.gt.f32.partialorder %v1411, 0.0
      %vm1428 = vcmp.gt.f32.partialorder %v1412, 0.0
      %vm1429 = vcmp.gt.f32.partialorder %v1413, 0.0
      %vm1430 = vcmp.gt.f32.partialorder %v1414, 0.0
      %vm1431 = vcmp.gt.f32.partialorder %v1415, 0.0
      %vm1432 = vcmp.gt.f32.partialorder %v1416, 0.0
      %vm1433 = vcmp.gt.f32.partialorder %v1417, 0.0
      %vm1434 = vcmp.gt.f32.partialorder %v1418, 0.0
      %vm1435 = vcmp.gt.f32.partialorder %v1419, 0.0
      %vm1436 = vcmp.gt.f32.partialorder %v1420, 0.0
      %v1437 = vmin.f32 %v1405, 0.0
      %v1438 = vmin.f32 %v1406, 0.0
      %v1439 = vmin.f32 %v1407, 0.0
      %v1440 = vmin.f32 %v1408, 0.0
      %v1441 = vmin.f32 %v1409, 0.0
      %v1442 = vmin.f32 %v1410, 0.0
      %v1443 = vmin.f32 %v1411, 0.0
      %v1444 = vmin.f32 %v1412, 0.0
      %v1445 = vmin.f32 %v1413, 0.0
      %v1446 = vmin.f32 %v1414, 0.0
      %v1447 = vmin.f32 %v1415, 0.0
      %v1448 = vmin.f32 %v1416, 0.0
      %v1449 = vmin.f32 %v1417, 0.0
      %v1450 = vmin.f32 %v1418, 0.0
      %v1451 = vmin.f32 %v1419, 0.0
      %v1452 = vmin.f32 %v1420, 0.0
      %v1453 = vmul.f32 %v1437, 1.442695
      %v1454 = vpow.pop %v1453
      %v1455 = vmul.f32 %v1438, 1.442695
      %v1456 = vpow.pop %v1455
      %v1457 = vmul.f32 %v1439, 1.442695
      %v1458 = vpow.pop %v1457
      %v1459 = vmul.f32 %v1440, 1.442695
      %v1460 = vpow.pop %v1459
      %v1461 = vmul.f32 %v1441, 1.442695
      %v1462 = vpow.pop %v1461
      %v1463 = vmul.f32 %v1442, 1.442695
      %v1464 = vpow.pop %v1463
      %v1465 = vmul.f32 %v1443, 1.442695
      %v1466 = vpow.pop %v1465
      %v1467 = vmul.f32 %v1444, 1.442695
      %v1468 = vpow.pop %v1467
      %v1469 = vmul.f32 %v1445, 1.442695
      %v1470 = vpow.pop %v1469
      %v1471 = vmul.f32 %v1446, 1.442695
      %v1472 = vpow.pop %v1471
      %v1473 = vmul.f32 %v1447, 1.442695
      %v1474 = vpow.pop %v1473
      %v1475 = vmul.f32 %v1448, 1.442695
      %v1476 = vpow.pop %v1475
      %v1477 = vmul.f32 %v1449, 1.442695
      %v1478 = vpow.pop %v1477
      %v1479 = vmul.f32 %v1450, 1.442695
      %v1480 = vpow.pop %v1479
      %v1481 = vmul.f32 %v1451, 1.442695
      %v1482 = vpow.pop %v1481
      %v1483 = vmul.f32 %v1452, 1.442695
      %v1484 = vpow.pop %v1483
      %v1485 = vsub.f32 %v1454, 1.0
      %v1486 = vsub.f32 %v1456, 1.0
      %v1487 = vsub.f32 %v1458, 1.0
      %v1488 = vsub.f32 %v1460, 1.0
      %v1489 = vsub.f32 %v1462, 1.0
      %v1490 = vsub.f32 %v1464, 1.0
      %v1491 = vsub.f32 %v1466, 1.0
      %v1492 = vsub.f32 %v1468, 1.0
      %v1493 = vsub.f32 %v1470, 1.0
      %v1494 = vsub.f32 %v1472, 1.0
      %v1495 = vsub.f32 %v1474, 1.0
      %v1496 = vsub.f32 %v1476, 1.0
      %v1497 = vsub.f32 %v1478, 1.0
      %v1498 = vsub.f32 %v1480, 1.0
      %v1499 = vsub.f32 %v1482, 1.0
      %v1500 = vsub.f32 %v1484, 1.0
      %v1501 = vsel %vm1421, %v1405, %v1485
      %v1502 = vsel %vm1422, %v1406, %v1486
      %v1503 = vsel %vm1423, %v1407, %v1487
      %v1504 = vsel %vm1424, %v1408, %v1488
      %v1505 = vsel %vm1425, %v1409, %v1489
      %v1506 = vsel %vm1426, %v1410, %v1490
      %v1507 = vsel %vm1427, %v1411, %v1491
      %v1508 = vsel %vm1428, %v1412, %v1492
      %v1509 = vsel %vm1429, %v1413, %v1493
      %v1510 = vsel %vm1430, %v1414, %v1494
      %v1511 = vsel %vm1431, %v1415, %v1495
      %v1512 = vsel %vm1432, %v1416, %v1496
      %v1513 = vsel %vm1433, %v1417, %v1497
      %v1514 = vsel %vm1434, %v1418, %v1498
      %v1515 = vsel %vm1435, %v1419, %v1499
      %v1516 = vsel %vm1436, %v1420, %v1500
      %vm1517 = vcmask 261120
      %v1518 = vsel %vm1517, %v1501, -inf
      %1519 = vmax.xlane.f32.xlu0 %v1518
      %v1520 = vpop.xlane.xlu0 %1519
      %v1521 = vsel %vm1517, %v1502, -inf
      %1522 = vmax.xlane.f32.xlu0 %v1521
      %v1523 = vpop.xlane.xlu0 %1522
      %v1524 = vsel %vm1517, %v1503, -inf
      %1525 = vmax.xlane.f32.xlu0 %v1524
      %v1526 = vpop.xlane.xlu0 %1525
      %v1527 = vsel %vm1517, %v1504, -inf
      %1528 = vmax.xlane.f32.xlu0 %v1527
      %v1529 = vpop.xlane.xlu0 %1528
      %v1530 = vsel %vm1517, %v1505, -inf
      %1531 = vmax.xlane.f32.xlu0 %v1530
      %v1532 = vpop.xlane.xlu0 %1531
      %v1533 = vsel %vm1517, %v1506, -inf
      %1534 = vmax.xlane.f32.xlu0 %v1533
      %v1535 = vpop.xlane.xlu0 %1534
      %v1536 = vsel %vm1517, %v1507, -inf
      %1537 = vmax.xlane.f32.xlu0 %v1536
      %v1538 = vpop.xlane.xlu0 %1537
      %v1539 = vsel %vm1517, %v1508, -inf
      %1540 = vmax.xlane.f32.xlu0 %v1539
      %v1541 = vpop.xlane.xlu0 %1540
      %v1542 = vsel %vm1517, %v1509, -inf
      %1543 = vmax.xlane.f32.xlu0 %v1542
      %v1544 = vpop.xlane.xlu0 %1543
      %v1545 = vsel %vm1517, %v1510, -inf
      %1546 = vmax.xlane.f32.xlu0 %v1545
      %v1547 = vpop.xlane.xlu0 %1546
      %v1548 = vsel %vm1517, %v1511, -inf
      %1549 = vmax.xlane.f32.xlu0 %v1548
      %v1550 = vpop.xlane.xlu0 %1549
      %v1551 = vsel %vm1517, %v1512, -inf
      %1552 = vmax.xlane.f32.xlu0 %v1551
      %v1553 = vpop.xlane.xlu0 %1552
      %v1554 = vsel %vm1517, %v1513, -inf
      %1555 = vmax.xlane.f32.xlu0 %v1554
      %v1556 = vpop.xlane.xlu0 %1555
      %v1557 = vsel %vm1517, %v1514, -inf
      %1558 = vmax.xlane.f32.xlu0 %v1557
      %v1559 = vpop.xlane.xlu0 %1558
      %v1560 = vsel %vm1517, %v1515, -inf
      %1561 = vmax.xlane.f32.xlu0 %v1560
      %v1562 = vpop.xlane.xlu0 %1561
      %v1563 = vsel %vm1517, %v1516, -inf
      %1564 = vmax.xlane.f32.xlu0 %v1563
      %v1565 = vpop.xlane.xlu0 %1564
      %v1566 = vsub.f32 %v1501, %v1520
      %v1567 = vsub.f32 %v1502, %v1523
      %v1568 = vsub.f32 %v1503, %v1526
      %v1569 = vsub.f32 %v1504, %v1529
      %v1570 = vsub.f32 %v1505, %v1532
      %v1571 = vsub.f32 %v1506, %v1535
      %v1572 = vsub.f32 %v1507, %v1538
      %v1573 = vsub.f32 %v1508, %v1541
      %v1574 = vsub.f32 %v1509, %v1544
      %v1575 = vsub.f32 %v1510, %v1547
      %v1576 = vsub.f32 %v1511, %v1550
      %v1577 = vsub.f32 %v1512, %v1553
      %v1578 = vsub.f32 %v1513, %v1556
      %v1579 = vsub.f32 %v1514, %v1559
      %v1580 = vsub.f32 %v1515, %v1562
      %v1581 = vsub.f32 %v1516, %v1565
      %v1582 = vmul.f32 %v1566, 1.442695
      %v1583 = vpow.pop %v1582
      %v1584 = vmul.f32 %v1567, 1.442695
      %v1585 = vpow.pop %v1584
      %v1586 = vmul.f32 %v1568, 1.442695
      %v1587 = vpow.pop %v1586
      %v1588 = vmul.f32 %v1569, 1.442695
      %v1589 = vpow.pop %v1588
      %v1590 = vmul.f32 %v1570, 1.442695
      %v1591 = vpow.pop %v1590
      %v1592 = vmul.f32 %v1571, 1.442695
      %v1593 = vpow.pop %v1592
      %v1594 = vmul.f32 %v1572, 1.442695
      %v1595 = vpow.pop %v1594
      %v1596 = vmul.f32 %v1573, 1.442695
      %v1597 = vpow.pop %v1596
      %v1598 = vmul.f32 %v1574, 1.442695
      %v1599 = vpow.pop %v1598
      %v1600 = vmul.f32 %v1575, 1.442695
      %v1601 = vpow.pop %v1600
      %v1602 = vmul.f32 %v1576, 1.442695
      %v1603 = vpow.pop %v1602
      %v1604 = vmul.f32 %v1577, 1.442695
      %v1605 = vpow.pop %v1604
      %v1606 = vmul.f32 %v1578, 1.442695
      %v1607 = vpow.pop %v1606
      %v1608 = vmul.f32 %v1579, 1.442695
      %v1609 = vpow.pop %v1608
      %v1610 = vmul.f32 %v1580, 1.442695
      %v1611 = vpow.pop %v1610
      %v1612 = vmul.f32 %v1581, 1.442695
      %v1613 = vpow.pop %v1612
      %v1614 = vsel %vm1517, %v1583, 0.0
      %1615 = vadd.xlane.f32.xlu0 %v1614
      %v1616 = vpop.xlane.xlu0 %1615
      %v1617 = vsel %vm1517, %v1585, 0.0
      %1618 = vadd.xlane.f32.xlu0 %v1617
      %v1619 = vpop.xlane.xlu0 %1618
      %v1620 = vsel %vm1517, %v1587, 0.0
      %1621 = vadd.xlane.f32.xlu0 %v1620
      %v1622 = vpop.xlane.xlu0 %1621
      %v1623 = vsel %vm1517, %v1589, 0.0
      %1624 = vadd.xlane.f32.xlu0 %v1623
      %v1625 = vpop.xlane.xlu0 %1624
      %v1626 = vsel %vm1517, %v1591, 0.0
      %1627 = vadd.xlane.f32.xlu0 %v1626
      %v1628 = vpop.xlane.xlu0 %1627
      %v1629 = vsel %vm1517, %v1593, 0.0
      %1630 = vadd.xlane.f32.xlu0 %v1629
      %v1631 = vpop.xlane.xlu0 %1630
      %v1632 = vsel %vm1517, %v1595, 0.0
      %1633 = vadd.xlane.f32.xlu0 %v1632
      %v1634 = vpop.xlane.xlu0 %1633
      %v1635 = vsel %vm1517, %v1597, 0.0
      %1636 = vadd.xlane.f32.xlu0 %v1635
      %v1637 = vpop.xlane.xlu0 %1636
      %v1638 = vsel %vm1517, %v1599, 0.0
      %1639 = vadd.xlane.f32.xlu0 %v1638
      %v1640 = vpop.xlane.xlu0 %1639
      %v1641 = vsel %vm1517, %v1601, 0.0
      %1642 = vadd.xlane.f32.xlu0 %v1641
      %v1643 = vpop.xlane.xlu0 %1642
      %v1644 = vsel %vm1517, %v1603, 0.0
      %1645 = vadd.xlane.f32.xlu0 %v1644
      %v1646 = vpop.xlane.xlu0 %1645
      %v1647 = vsel %vm1517, %v1605, 0.0
      %1648 = vadd.xlane.f32.xlu0 %v1647
      %v1649 = vpop.xlane.xlu0 %1648
      %v1650 = vsel %vm1517, %v1607, 0.0
      %1651 = vadd.xlane.f32.xlu0 %v1650
      %v1652 = vpop.xlane.xlu0 %1651
      %v1653 = vsel %vm1517, %v1609, 0.0
      %1654 = vadd.xlane.f32.xlu0 %v1653
      %v1655 = vpop.xlane.xlu0 %1654
      %v1656 = vsel %vm1517, %v1611, 0.0
      %1657 = vadd.xlane.f32.xlu0 %v1656
      %v1658 = vpop.xlane.xlu0 %1657
      %v1659 = vsel %vm1517, %v1613, 0.0
      %1660 = vadd.xlane.f32.xlu0 %v1659
      %v1661 = vpop.xlane.xlu0 %1660
      %v1662 = vlog2.pop %v1616
      %v1663 = vmul.f32 %v1662, 0.6931472
      %v1664 = vlog2.pop %v1619
      %v1665 = vmul.f32 %v1664, 0.6931472
      %v1666 = vlog2.pop %v1622
      %v1667 = vmul.f32 %v1666, 0.6931472
      %v1668 = vlog2.pop %v1625
      %v1669 = vmul.f32 %v1668, 0.6931472
      %v1670 = vlog2.pop %v1628
      %v1671 = vmul.f32 %v1670, 0.6931472
      %v1672 = vlog2.pop %v1631
      %v1673 = vmul.f32 %v1672, 0.6931472
      %v1674 = vlog2.pop %v1634
      %v1675 = vmul.f32 %v1674, 0.6931472
      %v1676 = vlog2.pop %v1637
      %v1677 = vmul.f32 %v1676, 0.6931472
      %v1678 = vlog2.pop %v1640
      %v1679 = vmul.f32 %v1678, 0.6931472
      %v1680 = vlog2.pop %v1643
      %v1681 = vmul.f32 %v1680, 0.6931472
      %v1682 = vlog2.pop %v1646
      %v1683 = vmul.f32 %v1682, 0.6931472
      %v1684 = vlog2.pop %v1649
      %v1685 = vmul.f32 %v1684, 0.6931472
      %v1686 = vlog2.pop %v1652
      %v1687 = vmul.f32 %v1686, 0.6931472
      %v1688 = vlog2.pop %v1655
      %v1689 = vmul.f32 %v1688, 0.6931472
      %v1690 = vlog2.pop %v1658
      %v1691 = vmul.f32 %v1690, 0.6931472
      %v1692 = vlog2.pop %v1661
      %v1693 = vmul.f32 %v1692, 0.6931472
      %v1694 = vsub.f32 %v1566, %v1663
      %v1695 = vsub.f32 %v1567, %v1665
      %v1696 = vsub.f32 %v1568, %v1667
      %v1697 = vsub.f32 %v1569, %v1669
      %v1698 = vsub.f32 %v1570, %v1671
      %v1699 = vsub.f32 %v1571, %v1673
      %v1700 = vsub.f32 %v1572, %v1675
      %v1701 = vsub.f32 %v1573, %v1677
      %v1702 = vsub.f32 %v1574, %v1679
      %v1703 = vsub.f32 %v1575, %v1681
      %v1704 = vsub.f32 %v1576, %v1683
      %v1705 = vsub.f32 %v1577, %v1685
      %v1706 = vsub.f32 %v1578, %v1687
      %v1707 = vsub.f32 %v1579, %v1689
      %v1708 = vsub.f32 %v1580, %v1691
      %v1709 = vsub.f32 %v1581, %v1693
      %v1710 = vld [vmem:[%s4] sm:$0xff]
      %v1711 = vld [vmem:[%s4 + $0x8] sm:$0xff]
      %v1712 = vld [vmem:[%s4 + $0x10] sm:$0xff]
      %v1713 = vld [vmem:[%s4 + $0x18] sm:$0xff]
      %v1714 = vld [vmem:[%s4 + $0x20] sm:$0xff]
      %v1715 = vld [vmem:[%s4 + $0x28] sm:$0xff]
      %v1716 = vld [vmem:[%s4 + $0x30] sm:$0xff]
      %v1717 = vld [vmem:[%s4 + $0x38] sm:$0xff]
      %v1719 = vsel %vm1517, %v572, 0
      %v1722 = vsel %vm1517, %v573, 0
      %v1725 = vsel %vm1517, %v574, 0
      %v1728 = vsel %vm1517, %v575, 0
      %v1731 = vsel %vm1517, %v576, 0
      %v1734 = vsel %vm1517, %v577, 0
      %v1737 = vsel %vm1517, %v578, 0
      %v1740 = vsel %vm1517, %v579, 0
      %v1743 = vsel %vm1517, %v580, 0
      %v1746 = vsel %vm1517, %v581, 0
      %v1749 = vsel %vm1517, %v582, 0
      %v1752 = vsel %vm1517, %v583, 0
      %v1755 = vsel %vm1517, %v584, 0
      %v1758 = vsel %vm1517, %v585, 0
      %v1761 = vsel %vm1517, %v586, 0
      %v1764 = vsel %vm1517, %v587, 0
      %1766 = vmatprep.subr.mxu0 0.0
      %1767 = vmatpush1.msra.mxu0 0.0
      %1768 = vmatprep.subr.mxu0 0.0
      %1769 = vmatpush1.msra.mxu0 0.0
      %1770 = vmatprep.subr.mxu0 0.0
      %1771 = vmatpush1.msra.mxu0 0.0
      %1772 = vmatprep.subr.mxu0 0.0
      %1773 = vmatpush1.msra.mxu0 0.0
      %1774 = vmatprep.subr.mxu0 0.0
      %1775 = vmatpush1.msra.mxu0 0.0
      %1776 = vmatprep.subr.mxu0 0.0
      %1777 = vmatpush1.msra.mxu0 0.0
      %1778 = vmatprep.subr.mxu0 0.0
      %1779 = vmatpush1.msra.mxu0 0.0
      %1780 = vmatprep.subr.mxu0 0.0
      %1781 = vmatpush1.msra.mxu0 0.0
      %1782 = vmatprep.subr.mxu0 0.0
      %1783 = vmatpush1.msra.mxu0 0.0
      %1784 = vmatprep.subr.mxu0 0.0
      %1785 = vmatpush1.msra.mxu0 0.0
      %1786 = vmatprep.subr.mxu0 0.0
      %1787 = vmatpush1.msra.mxu0 0.0
      %1788 = vmatprep.subr.mxu0 0.0
      %1789 = vmatpush1.msra.mxu0 0.0
      %1790 = vmatprep.subr.mxu0 0.0
      %1791 = vmatpush1.msra.mxu0 %v1717
      %1792 = vmatprep.subr.mxu0 0.0
      %1793 = vmatpush1.msra.mxu0 %v1716
      %1794 = vmatprep.subr.mxu0 0.0
      %1795 = vmatpush1.msra.mxu0 %v1715
      %1796 = vmatprep.subr.mxu0 0.0
      %1797 = vmatpush1.msra.mxu0 %v1714
      %1798 = vmatprep.subr.mxu0 0.0
      %1799 = vmatpush2.msra.mxu0 0.0
      %1800 = vmatprep.subr.mxu0 0.0
      %1801 = vmatpush2.msra.mxu0 0.0
      %1802 = vmatprep.subr.mxu0 0.0
      %1803 = vmatpush2.msra.mxu0 0.0
      %1804 = vmatprep.subr.mxu0 0.0
      %1805 = vmatpush2.msra.mxu0 0.0
      %1806 = vmatprep.subr.mxu0 0.0
      %1807 = vmatpush2.msra.mxu0 0.0
      %1808 = vmatprep.subr.mxu0 0.0
      %1809 = vmatpush2.msra.mxu0 0.0
      %1810 = vmatprep.subr.mxu0 0.0
      %1811 = vmatpush2.msra.mxu0 0.0
      %1812 = vmatprep.subr.mxu0 0.0
      %1813 = vmatpush2.msra.mxu0 0.0
      %1814 = vmatprep.subr.mxu0 0.0
      %1815 = vmatpush2.msra.mxu0 0.0
      %1816 = vmatprep.subr.mxu0 0.0
      %1817 = vmatpush2.msra.mxu0 0.0
      %1818 = vmatprep.subr.mxu0 0.0
      %1819 = vmatpush2.msra.mxu0 0.0
      %1820 = vmatprep.subr.mxu0 0.0
      %1821 = vmatpush2.msra.mxu0 0.0
      %1822 = vmatprep.subr.mxu0 0.0
      %1823 = vmatpush2.msra.mxu0 0.0
      %1824 = vmatprep.subr.mxu0 0.0
      %1825 = vmatpush2.msra.mxu0 0.0
      %1826 = vmatprep.subr.mxu0 0.0
      %1827 = vmatpush2.msra.mxu0 0.0
      %1828 = vmatprep.subr.mxu0 0.0
      %1829 = vmatpush2.msra.mxu0 0.0
      %1830 = vmatprep.mubr.f32.mxu0 0.0
      %1831 = vmatmul.mubr.f32.gmra.mxu0 %v1719
      %v1832 = vpop.f32.mrf.mxu0
      %v1833 = vadd.f32 0.0, %v1832
      %v1834 = vpop.f32.mrf.mxu0
      %1835 = vmatprep.mubr.f32.mxu0 0.0
      %1836 = vmatmul.mubr.f32.gmra.mxu0 %v1722
      %v1837 = vpop.f32.mrf.mxu0
      %v1838 = vadd.f32 0.0, %v1837
      %v1839 = vpop.f32.mrf.mxu0
      %1840 = vmatprep.mubr.f32.mxu0 0.0
      %1841 = vmatmul.mubr.f32.gmra.mxu0 %v1725
      %v1842 = vpop.f32.mrf.mxu0
      %v1843 = vadd.f32 0.0, %v1842
      %v1844 = vpop.f32.mrf.mxu0
      %1845 = vmatprep.mubr.f32.mxu0 0.0
      %1846 = vmatmul.mubr.f32.gmra.mxu0 %v1728
      %v1847 = vpop.f32.mrf.mxu0
      %v1848 = vadd.f32 0.0, %v1847
      %v1849 = vpop.f32.mrf.mxu0
      %1850 = vmatprep.mubr.f32.mxu0 0.0
      %1851 = vmatmul.mubr.f32.gmra.mxu0 %v1731
      %v1852 = vpop.f32.mrf.mxu0
      %v1853 = vadd.f32 0.0, %v1852
      %v1854 = vpop.f32.mrf.mxu0
      %1855 = vmatprep.mubr.f32.mxu0 0.0
      %1856 = vmatmul.mubr.f32.gmra.mxu0 %v1734
      %v1857 = vpop.f32.mrf.mxu0
      %v1858 = vadd.f32 0.0, %v1857
      %v1859 = vpop.f32.mrf.mxu0
      %1860 = vmatprep.mubr.f32.mxu0 0.0
      %1861 = vmatmul.mubr.f32.gmra.mxu0 %v1737
      %v1862 = vpop.f32.mrf.mxu0
      %v1863 = vadd.f32 0.0, %v1862
      %v1864 = vpop.f32.mrf.mxu0
      %1865 = vmatprep.mubr.f32.mxu0 0.0
      %1866 = vmatmul.mubr.f32.gmra.mxu0 %v1740
      %v1867 = vpop.f32.mrf.mxu0
      %v1868 = vadd.f32 0.0, %v1867
      %v1869 = vpop.f32.mrf.mxu0
      %1870 = vmatprep.mubr.f32.mxu0 0.0
      %1871 = vmatmul.mubr.f32.gmra.mxu0 %v1743
      %v1872 = vpop.f32.mrf.mxu0
      %v1873 = vadd.f32 0.0, %v1872
      %v1874 = vpop.f32.mrf.mxu0
      %1875 = vmatprep.mubr.f32.mxu0 0.0
      %1876 = vmatmul.mubr.f32.gmra.mxu0 %v1746
      %v1877 = vpop.f32.mrf.mxu0
      %v1878 = vadd.f32 0.0, %v1877
      %v1879 = vpop.f32.mrf.mxu0
      %1880 = vmatprep.mubr.f32.mxu0 0.0
      %1881 = vmatmul.mubr.f32.gmra.mxu0 %v1749
      %v1882 = vpop.f32.mrf.mxu0
      %v1883 = vadd.f32 0.0, %v1882
      %v1884 = vpop.f32.mrf.mxu0
      %1885 = vmatprep.mubr.f32.mxu0 0.0
      %1886 = vmatmul.mubr.f32.gmra.mxu0 %v1752
      %v1887 = vpop.f32.mrf.mxu0
      %v1888 = vadd.f32 0.0, %v1887
      %v1889 = vpop.f32.mrf.mxu0
      %1890 = vmatprep.mubr.f32.mxu0 0.0
      %1891 = vmatmul.mubr.f32.gmra.mxu0 %v1755
      %v1892 = vpop.f32.mrf.mxu0
      %v1893 = vadd.f32 0.0, %v1892
      %v1894 = vpop.f32.mrf.mxu0
      %1895 = vmatprep.mubr.f32.mxu0 0.0
      %1896 = vmatmul.mubr.f32.gmra.mxu0 %v1758
      %v1897 = vpop.f32.mrf.mxu0
      %v1898 = vadd.f32 0.0, %v1897
      %v1899 = vpop.f32.mrf.mxu0
      %1900 = vmatprep.mubr.f32.mxu0 0.0
      %1901 = vmatmul.mubr.f32.gmra.mxu0 %v1761
      %v1902 = vpop.f32.mrf.mxu0
      %v1903 = vadd.f32 0.0, %v1902
      %v1904 = vpop.f32.mrf.mxu0
      %1905 = vmatprep.mubr.f32.mxu0 0.0
      %1906 = vmatmul.mubr.f32.gmra.mxu0 %v1764
      %v1907 = vpop.f32.mrf.mxu0
      %v1908 = vadd.f32 0.0, %v1907
      %v1909 = vpop.f32.mrf.mxu0
      %1910 = vdwg.mxu0
      %v1912 = vsel %vm1517, %v1694, 0
      %v1915 = vsel %vm1517, %v1695, 0
      %v1918 = vsel %vm1517, %v1696, 0
      %v1921 = vsel %vm1517, %v1697, 0
      %v1924 = vsel %vm1517, %v1698, 0
      %v1927 = vsel %vm1517, %v1699, 0
      %v1930 = vsel %vm1517, %v1700, 0
      %v1933 = vsel %vm1517, %v1701, 0
      %v1936 = vsel %vm1517, %v1702, 0
      %v1939 = vsel %vm1517, %v1703, 0
      %v1942 = vsel %vm1517, %v1704, 0
      %v1945 = vsel %vm1517, %v1705, 0
      %v1948 = vsel %vm1517, %v1706, 0
      %v1951 = vsel %vm1517, %v1707, 0
      %v1954 = vsel %vm1517, %v1708, 0
      %v1957 = vsel %vm1517, %v1709, 0
      %1959 = vmatprep.subr.mxu0 0.0
      %1960 = vmatpush1.msra.mxu0 0.0
      %1961 = vmatprep.subr.mxu0 0.0
      %1962 = vmatpush1.msra.mxu0 0.0
      %1963 = vmatprep.subr.mxu0 0.0
      %1964 = vmatpush1.msra.mxu0 0.0
      %1965 = vmatprep.subr.mxu0 0.0
      %1966 = vmatpush1.msra.mxu0 0.0
      %1967 = vmatprep.subr.mxu0 0.0
      %1968 = vmatpush1.msra.mxu0 0.0
      %1969 = vmatprep.subr.mxu0 0.0
      %1970 = vmatpush1.msra.mxu0 0.0
      %1971 = vmatprep.subr.mxu0 0.0
      %1972 = vmatpush1.msra.mxu0 0.0
      %1973 = vmatprep.subr.mxu0 0.0
      %1974 = vmatpush1.msra.mxu0 0.0
      %1975 = vmatprep.subr.mxu0 0.0
      %1976 = vmatpush1.msra.mxu0 0.0
      %1977 = vmatprep.subr.mxu0 0.0
      %1978 = vmatpush1.msra.mxu0 0.0
      %1979 = vmatprep.subr.mxu0 0.0
      %1980 = vmatpush1.msra.mxu0 0.0
      %1981 = vmatprep.subr.mxu0 0.0
      %1982 = vmatpush1.msra.mxu0 0.0
      %1983 = vmatprep.subr.mxu0 0.0
      %1984 = vmatpush1.msra.mxu0 %v1713
      %1985 = vmatprep.subr.mxu0 0.0
      %1986 = vmatpush1.msra.mxu0 %v1712
      %1987 = vmatprep.subr.mxu0 0.0
      %1988 = vmatpush1.msra.mxu0 %v1711
      %1989 = vmatprep.subr.mxu0 0.0
      %1990 = vmatpush1.msra.mxu0 %v1710
      %1991 = vmatprep.subr.mxu0 0.0
      %1992 = vmatpush2.msra.mxu0 0.0
      %1993 = vmatprep.subr.mxu0 0.0
      %1994 = vmatpush2.msra.mxu0 0.0
      %1995 = vmatprep.subr.mxu0 0.0
      %1996 = vmatpush2.msra.mxu0 0.0
      %1997 = vmatprep.subr.mxu0 0.0
      %1998 = vmatpush2.msra.mxu0 0.0
      %1999 = vmatprep.subr.mxu0 0.0
      %2000 = vmatpush2.msra.mxu0 0.0
      %2001 = vmatprep.subr.mxu0 0.0
      %2002 = vmatpush2.msra.mxu0 0.0
      %2003 = vmatprep.subr.mxu0 0.0
      %2004 = vmatpush2.msra.mxu0 0.0
      %2005 = vmatprep.subr.mxu0 0.0
      %2006 = vmatpush2.msra.mxu0 0.0
      %2007 = vmatprep.subr.mxu0 0.0
      %2008 = vmatpush2.msra.mxu0 0.0
      %2009 = vmatprep.subr.mxu0 0.0
      %2010 = vmatpush2.msra.mxu0 0.0
      %2011 = vmatprep.subr.mxu0 0.0
      %2012 = vmatpush2.msra.mxu0 0.0
      %2013 = vmatprep.subr.mxu0 0.0
      %2014 = vmatpush2.msra.mxu0 0.0
      %2015 = vmatprep.subr.mxu0 0.0
      %2016 = vmatpush2.msra.mxu0 0.0
      %2017 = vmatprep.subr.mxu0 0.0
      %2018 = vmatpush2.msra.mxu0 0.0
      %2019 = vmatprep.subr.mxu0 0.0
      %2020 = vmatpush2.msra.mxu0 0.0
      %2021 = vmatprep.subr.mxu0 0.0
      %2022 = vmatpush2.msra.mxu0 0.0
      %2023 = vmatprep.mubr.f32.mxu0 0.0
      %2024 = vmatmul.mubr.f32.gmra.mxu0 %v1912
      %v2025 = vpop.f32.mrf.mxu0
      %v2026 = vadd.f32 %v1833, %v2025
      %v2027 = vpop.f32.mrf.mxu0
      %2028 = vmatprep.mubr.f32.mxu0 0.0
      %2029 = vmatmul.mubr.f32.gmra.mxu0 %v1915
      %v2030 = vpop.f32.mrf.mxu0
      %v2031 = vadd.f32 %v1838, %v2030
      %v2032 = vpop.f32.mrf.mxu0
      %2033 = vmatprep.mubr.f32.mxu0 0.0
      %2034 = vmatmul.mubr.f32.gmra.mxu0 %v1918
      %v2035 = vpop.f32.mrf.mxu0
      %v2036 = vadd.f32 %v1843, %v2035
      %v2037 = vpop.f32.mrf.mxu0
      %2038 = vmatprep.mubr.f32.mxu0 0.0
      %2039 = vmatmul.mubr.f32.gmra.mxu0 %v1921
      %v2040 = vpop.f32.mrf.mxu0
      %v2041 = vadd.f32 %v1848, %v2040
      %v2042 = vpop.f32.mrf.mxu0
      %2043 = vmatprep.mubr.f32.mxu0 0.0
      %2044 = vmatmul.mubr.f32.gmra.mxu0 %v1924
      %v2045 = vpop.f32.mrf.mxu0
      %v2046 = vadd.f32 %v1853, %v2045
      %v2047 = vpop.f32.mrf.mxu0
      %2048 = vmatprep.mubr.f32.mxu0 0.0
      %2049 = vmatmul.mubr.f32.gmra.mxu0 %v1927
      %v2050 = vpop.f32.mrf.mxu0
      %v2051 = vadd.f32 %v1858, %v2050
      %v2052 = vpop.f32.mrf.mxu0
      %2053 = vmatprep.mubr.f32.mxu0 0.0
      %2054 = vmatmul.mubr.f32.gmra.mxu0 %v1930
      %v2055 = vpop.f32.mrf.mxu0
      %v2056 = vadd.f32 %v1863, %v2055
      %v2057 = vpop.f32.mrf.mxu0
      %2058 = vmatprep.mubr.f32.mxu0 0.0
      %2059 = vmatmul.mubr.f32.gmra.mxu0 %v1933
      %v2060 = vpop.f32.mrf.mxu0
      %v2061 = vadd.f32 %v1868, %v2060
      %v2062 = vpop.f32.mrf.mxu0
      %2063 = vmatprep.mubr.f32.mxu0 0.0
      %2064 = vmatmul.mubr.f32.gmra.mxu0 %v1936
      %v2065 = vpop.f32.mrf.mxu0
      %v2066 = vadd.f32 %v1873, %v2065
      %v2067 = vpop.f32.mrf.mxu0
      %2068 = vmatprep.mubr.f32.mxu0 0.0
      %2069 = vmatmul.mubr.f32.gmra.mxu0 %v1939
      %v2070 = vpop.f32.mrf.mxu0
      %v2071 = vadd.f32 %v1878, %v2070
      %v2072 = vpop.f32.mrf.mxu0
      %2073 = vmatprep.mubr.f32.mxu0 0.0
      %2074 = vmatmul.mubr.f32.gmra.mxu0 %v1942
      %v2075 = vpop.f32.mrf.mxu0
      %v2076 = vadd.f32 %v1883, %v2075
      %v2077 = vpop.f32.mrf.mxu0
      %2078 = vmatprep.mubr.f32.mxu0 0.0
      %2079 = vmatmul.mubr.f32.gmra.mxu0 %v1945
      %v2080 = vpop.f32.mrf.mxu0
      %v2081 = vadd.f32 %v1888, %v2080
      %v2082 = vpop.f32.mrf.mxu0
      %2083 = vmatprep.mubr.f32.mxu0 0.0
      %2084 = vmatmul.mubr.f32.gmra.mxu0 %v1948
      %v2085 = vpop.f32.mrf.mxu0
      %v2086 = vadd.f32 %v1893, %v2085
      %v2087 = vpop.f32.mrf.mxu0
      %2088 = vmatprep.mubr.f32.mxu0 0.0
      %2089 = vmatmul.mubr.f32.gmra.mxu0 %v1951
      %v2090 = vpop.f32.mrf.mxu0
      %v2091 = vadd.f32 %v1898, %v2090
      %v2092 = vpop.f32.mrf.mxu0
      %2093 = vmatprep.mubr.f32.mxu0 0.0
      %2094 = vmatmul.mubr.f32.gmra.mxu0 %v1954
      %v2095 = vpop.f32.mrf.mxu0
      %v2096 = vadd.f32 %v1903, %v2095
      %v2097 = vpop.f32.mrf.mxu0
      %2098 = vmatprep.mubr.f32.mxu0 0.0
      %2099 = vmatmul.mubr.f32.gmra.mxu0 %v1957
      %v2100 = vpop.f32.mrf.mxu0
      %v2101 = vadd.f32 %v1908, %v2100
      %v2102 = vpop.f32.mrf.mxu0
      %2103 = vdwg.mxu0
      %v2104 = vlaneseq
      %v2105 = vshrl.u32 %v2104, 7
      %v2106 = vsub.s32 0, %v2105
      %v2107 = vrot.slane %v370, %v2106
      %v2108 = vadd.f32 %v2026, %v2107
      %v2109 = vadd.f32 %v2031, %v2107
      %v2110 = vadd.f32 %v2036, %v2107
      %v2111 = vadd.f32 %v2041, %v2107
      %v2112 = vadd.f32 %v2046, %v2107
      %v2113 = vadd.f32 %v2051, %v2107
      %v2114 = vadd.f32 %v2056, %v2107
      %v2115 = vadd.f32 %v2061, %v2107
      %v2116 = vadd.f32 %v2066, %v2107
      %v2117 = vadd.f32 %v2071, %v2107
      %v2118 = vadd.f32 %v2076, %v2107
      %v2119 = vadd.f32 %v2081, %v2107
      %v2120 = vadd.f32 %v2086, %v2107
      %v2121 = vadd.f32 %v2091, %v2107
      %v2122 = vadd.f32 %v2096, %v2107
      %v2123 = vadd.f32 %v2101, %v2107
      %v2124 = vxor.u32 %v2108, 2147483648
      %v2125 = vxor.u32 %v2109, 2147483648
      %v2126 = vxor.u32 %v2110, 2147483648
      %v2127 = vxor.u32 %v2111, 2147483648
      %v2128 = vxor.u32 %v2112, 2147483648
      %v2129 = vxor.u32 %v2113, 2147483648
      %v2130 = vxor.u32 %v2114, 2147483648
      %v2131 = vxor.u32 %v2115, 2147483648
      %v2132 = vxor.u32 %v2116, 2147483648
      %v2133 = vxor.u32 %v2117, 2147483648
      %v2134 = vxor.u32 %v2118, 2147483648
      %v2135 = vxor.u32 %v2119, 2147483648
      %v2136 = vxor.u32 %v2120, 2147483648
      %v2137 = vxor.u32 %v2121, 2147483648
      %v2138 = vxor.u32 %v2122, 2147483648
      %v2139 = vxor.u32 %v2123, 2147483648
      %v2140 = vmul.f32 %v2124, 1.442695
      %v2141 = vpow.pop %v2140
      %v2142 = vmul.f32 %v2125, 1.442695
      %v2143 = vpow.pop %v2142
      %v2144 = vmul.f32 %v2126, 1.442695
      %v2145 = vpow.pop %v2144
      %v2146 = vmul.f32 %v2127, 1.442695
      %v2147 = vpow.pop %v2146
      %v2148 = vmul.f32 %v2128, 1.442695
      %v2149 = vpow.pop %v2148
      %v2150 = vmul.f32 %v2129, 1.442695
      %v2151 = vpow.pop %v2150
      %v2152 = vmul.f32 %v2130, 1.442695
      %v2153 = vpow.pop %v2152
      %v2154 = vmul.f32 %v2131, 1.442695
      %v2155 = vpow.pop %v2154
      %v2156 = vmul.f32 %v2132, 1.442695
      %v2157 = vpow.pop %v2156
      %v2158 = vmul.f32 %v2133, 1.442695
      %v2159 = vpow.pop %v2158
      %v2160 = vmul.f32 %v2134, 1.442695
      %v2161 = vpow.pop %v2160
      %v2162 = vmul.f32 %v2135, 1.442695
      %v2163 = vpow.pop %v2162
      %v2164 = vmul.f32 %v2136, 1.442695
      %v2165 = vpow.pop %v2164
      %v2166 = vmul.f32 %v2137, 1.442695
      %v2167 = vpow.pop %v2166
      %v2168 = vmul.f32 %v2138, 1.442695
      %v2169 = vpow.pop %v2168
      %v2170 = vmul.f32 %v2139, 1.442695
      %v2171 = vpow.pop %v2170
      %v2172 = vadd.f32 %v2141, 1.0
      %v2173 = vadd.f32 %v2143, 1.0
      %v2174 = vadd.f32 %v2145, 1.0
      %v2175 = vadd.f32 %v2147, 1.0
      %v2176 = vadd.f32 %v2149, 1.0
      %v2177 = vadd.f32 %v2151, 1.0
      %v2178 = vadd.f32 %v2153, 1.0
      %v2179 = vadd.f32 %v2155, 1.0
      %v2180 = vadd.f32 %v2157, 1.0
      %v2181 = vadd.f32 %v2159, 1.0
      %v2182 = vadd.f32 %v2161, 1.0
      %v2183 = vadd.f32 %v2163, 1.0
      %v2184 = vadd.f32 %v2165, 1.0
      %v2185 = vadd.f32 %v2167, 1.0
      %v2186 = vadd.f32 %v2169, 1.0
      %v2187 = vadd.f32 %v2171, 1.0
      %v2188 = vrcp.pop %v2172
      %v2189 = vmul.f32 1.0, %v2188
      %v2190 = vrcp.pop %v2173
      %v2191 = vmul.f32 1.0, %v2190
      %v2192 = vrcp.pop %v2174
      %v2193 = vmul.f32 1.0, %v2192
      %v2194 = vrcp.pop %v2175
      %v2195 = vmul.f32 1.0, %v2194
      %v2196 = vrcp.pop %v2176
      %v2197 = vmul.f32 1.0, %v2196
      %v2198 = vrcp.pop %v2177
      %v2199 = vmul.f32 1.0, %v2198
      %v2200 = vrcp.pop %v2178
      %v2201 = vmul.f32 1.0, %v2200
      %v2202 = vrcp.pop %v2179
      %v2203 = vmul.f32 1.0, %v2202
      %v2204 = vrcp.pop %v2180
      %v2205 = vmul.f32 1.0, %v2204
      %v2206 = vrcp.pop %v2181
      %v2207 = vmul.f32 1.0, %v2206
      %v2208 = vrcp.pop %v2182
      %v2209 = vmul.f32 1.0, %v2208
      %v2210 = vrcp.pop %v2183
      %v2211 = vmul.f32 1.0, %v2210
      %v2212 = vrcp.pop %v2184
      %v2213 = vmul.f32 1.0, %v2212
      %v2214 = vrcp.pop %v2185
      %v2215 = vmul.f32 1.0, %v2214
      %v2216 = vrcp.pop %v2186
      %v2217 = vmul.f32 1.0, %v2216
      %v2218 = vrcp.pop %v2187
      %v2219 = vmul.f32 1.0, %v2218
      %2236 = vrot.lane.b32.xlu0 %v2108, 32
      %v2237 = vpop.permute.xlu0 %2236
      %2238 = vrot.lane.b32.xlu0 %v2109, 32
      %v2239 = vpop.permute.xlu0 %2238
      %2240 = vrot.lane.b32.xlu0 %v2110, 32
      %v2241 = vpop.permute.xlu0 %2240
      %2242 = vrot.lane.b32.xlu0 %v2111, 32
      %v2243 = vpop.permute.xlu0 %2242
      %2244 = vrot.lane.b32.xlu0 %v2112, 32
      %v2245 = vpop.permute.xlu0 %2244
      %2246 = vrot.lane.b32.xlu0 %v2113, 32
      %v2247 = vpop.permute.xlu0 %2246
      %2248 = vrot.lane.b32.xlu0 %v2114, 32
      %v2249 = vpop.permute.xlu0 %2248
      %2250 = vrot.lane.b32.xlu0 %v2115, 32
      %v2251 = vpop.permute.xlu0 %2250
      %2252 = vrot.lane.b32.xlu0 %v2116, 32
      %v2253 = vpop.permute.xlu0 %2252
      %2254 = vrot.lane.b32.xlu0 %v2117, 32
      %v2255 = vpop.permute.xlu0 %2254
      %2256 = vrot.lane.b32.xlu0 %v2118, 32
      %v2257 = vpop.permute.xlu0 %2256
      %2258 = vrot.lane.b32.xlu0 %v2119, 32
      %v2259 = vpop.permute.xlu0 %2258
      %2260 = vrot.lane.b32.xlu0 %v2120, 32
      %v2261 = vpop.permute.xlu0 %2260
      %2262 = vrot.lane.b32.xlu0 %v2121, 32
      %v2263 = vpop.permute.xlu0 %2262
      %2264 = vrot.lane.b32.xlu0 %v2122, 32
      %v2265 = vpop.permute.xlu0 %2264
      %2266 = vrot.lane.b32.xlu0 %v2123, 32
      %v2267 = vpop.permute.xlu0 %2266
      %v2284 = vmul.f32 %v2189, %v2237
      %v2285 = vmul.f32 %v2191, %v2239
      %v2286 = vmul.f32 %v2193, %v2241
      %v2287 = vmul.f32 %v2195, %v2243
      %v2288 = vmul.f32 %v2197, %v2245
      %v2289 = vmul.f32 %v2199, %v2247
      %v2290 = vmul.f32 %v2201, %v2249
      %v2291 = vmul.f32 %v2203, %v2251
      %v2292 = vmul.f32 %v2205, %v2253
      %v2293 = vmul.f32 %v2207, %v2255
      %v2294 = vmul.f32 %v2209, %v2257
      %v2295 = vmul.f32 %v2211, %v2259
      %v2296 = vmul.f32 %v2213, %v2261
      %v2297 = vmul.f32 %v2215, %v2263
      %v2298 = vmul.f32 %v2217, %v2265
      %v2299 = vmul.f32 %v2219, %v2267
      %2316 = vrot.lane.b32.xlu0 %v2284, 64
      %v2317 = vpop.permute.xlu0 %2316
      %2318 = vrot.lane.b32.xlu0 %v2285, 64
      %v2319 = vpop.permute.xlu0 %2318
      %2320 = vrot.lane.b32.xlu0 %v2286, 64
      %v2321 = vpop.permute.xlu0 %2320
      %2322 = vrot.lane.b32.xlu0 %v2287, 64
      %v2323 = vpop.permute.xlu0 %2322
      %2324 = vrot.lane.b32.xlu0 %v2288, 64
      %v2325 = vpop.permute.xlu0 %2324
      %2326 = vrot.lane.b32.xlu0 %v2289, 64
      %v2327 = vpop.permute.xlu0 %2326
      %2328 = vrot.lane.b32.xlu0 %v2290, 64
      %v2329 = vpop.permute.xlu0 %2328
      %2330 = vrot.lane.b32.xlu0 %v2291, 64
      %v2331 = vpop.permute.xlu0 %2330
      %2332 = vrot.lane.b32.xlu0 %v2292, 64
      %v2333 = vpop.permute.xlu0 %2332
      %2334 = vrot.lane.b32.xlu0 %v2293, 64
      %v2335 = vpop.permute.xlu0 %2334
      %2336 = vrot.lane.b32.xlu0 %v2294, 64
      %v2337 = vpop.permute.xlu0 %2336
      %2338 = vrot.lane.b32.xlu0 %v2295, 64
      %v2339 = vpop.permute.xlu0 %2338
      %2340 = vrot.lane.b32.xlu0 %v2296, 64
      %v2341 = vpop.permute.xlu0 %2340
      %2342 = vrot.lane.b32.xlu0 %v2297, 64
      %v2343 = vpop.permute.xlu0 %2342
      %2344 = vrot.lane.b32.xlu0 %v2298, 64
      %v2345 = vpop.permute.xlu0 %2344
      %2346 = vrot.lane.b32.xlu0 %v2299, 64
      %v2347 = vpop.permute.xlu0 %2346
      %v2364 = vadd.f32 %v2108, %v2317
      %v2365 = vadd.f32 %v2109, %v2319
      %v2366 = vadd.f32 %v2110, %v2321
      %v2367 = vadd.f32 %v2111, %v2323
      %v2368 = vadd.f32 %v2112, %v2325
      %v2369 = vadd.f32 %v2113, %v2327
      %v2370 = vadd.f32 %v2114, %v2329
      %v2371 = vadd.f32 %v2115, %v2331
      %v2372 = vadd.f32 %v2116, %v2333
      %v2373 = vadd.f32 %v2117, %v2335
      %v2374 = vadd.f32 %v2118, %v2337
      %v2375 = vadd.f32 %v2119, %v2339
      %v2376 = vadd.f32 %v2120, %v2341
      %v2377 = vadd.f32 %v2121, %v2343
      %v2378 = vadd.f32 %v2122, %v2345
      %v2379 = vadd.f32 %v2123, %v2347
      %v2380 = vtanh.pop %v2364
      %v2381 = vtanh.pop %v2365
      %v2382 = vtanh.pop %v2366
      %v2383 = vtanh.pop %v2367
      %v2384 = vtanh.pop %v2368
      %v2385 = vtanh.pop %v2369
      %v2386 = vtanh.pop %v2370
      %v2387 = vtanh.pop %v2371
      %v2388 = vtanh.pop %v2372
      %v2389 = vtanh.pop %v2373
      %v2390 = vtanh.pop %v2374
      %v2391 = vtanh.pop %v2375
      %v2392 = vtanh.pop %v2376
      %v2393 = vtanh.pop %v2377
      %v2394 = vtanh.pop %v2378
      %v2395 = vtanh.pop %v2379
      %v2396 = vsub.f32 1.0, %v2189
      %v2397 = vsub.f32 1.0, %v2191
      %v2398 = vsub.f32 1.0, %v2193
      %v2399 = vsub.f32 1.0, %v2195
      %v2400 = vsub.f32 1.0, %v2197
      %v2401 = vsub.f32 1.0, %v2199
      %v2402 = vsub.f32 1.0, %v2201
      %v2403 = vsub.f32 1.0, %v2203
      %v2404 = vsub.f32 1.0, %v2205
      %v2405 = vsub.f32 1.0, %v2207
      %v2406 = vsub.f32 1.0, %v2209
      %v2407 = vsub.f32 1.0, %v2211
      %v2408 = vsub.f32 1.0, %v2213
      %v2409 = vsub.f32 1.0, %v2215
      %v2410 = vsub.f32 1.0, %v2217
      %v2411 = vsub.f32 1.0, %v2219
      %2428 = vrot.lane.b32.xlu0 %v2380, 96
      %v2429 = vpop.permute.xlu0 %2428
      %2430 = vrot.lane.b32.xlu0 %v2381, 96
      %v2431 = vpop.permute.xlu0 %2430
      %2432 = vrot.lane.b32.xlu0 %v2382, 96
      %v2433 = vpop.permute.xlu0 %2432
      %2434 = vrot.lane.b32.xlu0 %v2383, 96
      %v2435 = vpop.permute.xlu0 %2434
      %2436 = vrot.lane.b32.xlu0 %v2384, 96
      %v2437 = vpop.permute.xlu0 %2436
      %2438 = vrot.lane.b32.xlu0 %v2385, 96
      %v2439 = vpop.permute.xlu0 %2438
      %2440 = vrot.lane.b32.xlu0 %v2386, 96
      %v2441 = vpop.permute.xlu0 %2440
      %2442 = vrot.lane.b32.xlu0 %v2387, 96
      %v2443 = vpop.permute.xlu0 %2442
      %2444 = vrot.lane.b32.xlu0 %v2388, 96
      %v2445 = vpop.permute.xlu0 %2444
      %2446 = vrot.lane.b32.xlu0 %v2389, 96
      %v2447 = vpop.permute.xlu0 %2446
      %2448 = vrot.lane.b32.xlu0 %v2390, 96
      %v2449 = vpop.permute.xlu0 %2448
      %2450 = vrot.lane.b32.xlu0 %v2391, 96
      %v2451 = vpop.permute.xlu0 %2450
      %2452 = vrot.lane.b32.xlu0 %v2392, 96
      %v2453 = vpop.permute.xlu0 %2452
      %2454 = vrot.lane.b32.xlu0 %v2393, 96
      %v2455 = vpop.permute.xlu0 %2454
      %2456 = vrot.lane.b32.xlu0 %v2394, 96
      %v2457 = vpop.permute.xlu0 %2456
      %2458 = vrot.lane.b32.xlu0 %v2395, 96
      %v2459 = vpop.permute.xlu0 %2458
      %v2476 = vmul.f32 %v2396, %v2429
      %v2477 = vmul.f32 %v2397, %v2431
      %v2478 = vmul.f32 %v2398, %v2433
      %v2479 = vmul.f32 %v2399, %v2435
      %v2480 = vmul.f32 %v2400, %v2437
      %v2481 = vmul.f32 %v2401, %v2439
      %v2482 = vmul.f32 %v2402, %v2441
      %v2483 = vmul.f32 %v2403, %v2443
      %v2484 = vmul.f32 %v2404, %v2445
      %v2485 = vmul.f32 %v2405, %v2447
      %v2486 = vmul.f32 %v2406, %v2449
      %v2487 = vmul.f32 %v2407, %v2451
      %v2488 = vmul.f32 %v2408, %v2453
      %v2489 = vmul.f32 %v2409, %v2455
      %v2490 = vmul.f32 %v2410, %v2457
      %v2491 = vmul.f32 %v2411, %v2459
      %2492 = vrot.lane.b32.xlu0 %v572, 32
      %v2493 = vpop.permute.xlu0 %2492
      %2494 = vrot.lane.b32.xlu0 %v573, 32
      %v2495 = vpop.permute.xlu0 %2494
      %2496 = vrot.lane.b32.xlu0 %v574, 32
      %v2497 = vpop.permute.xlu0 %2496
      %2498 = vrot.lane.b32.xlu0 %v575, 32
      %v2499 = vpop.permute.xlu0 %2498
      %2500 = vrot.lane.b32.xlu0 %v576, 32
      %v2501 = vpop.permute.xlu0 %2500
      %2502 = vrot.lane.b32.xlu0 %v577, 32
      %v2503 = vpop.permute.xlu0 %2502
      %2504 = vrot.lane.b32.xlu0 %v578, 32
      %v2505 = vpop.permute.xlu0 %2504
      %2506 = vrot.lane.b32.xlu0 %v579, 32
      %v2507 = vpop.permute.xlu0 %2506
      %2508 = vrot.lane.b32.xlu0 %v580, 32
      %v2509 = vpop.permute.xlu0 %2508
      %2510 = vrot.lane.b32.xlu0 %v581, 32
      %v2511 = vpop.permute.xlu0 %2510
      %2512 = vrot.lane.b32.xlu0 %v582, 32
      %v2513 = vpop.permute.xlu0 %2512
      %2514 = vrot.lane.b32.xlu0 %v583, 32
      %v2515 = vpop.permute.xlu0 %2514
      %2516 = vrot.lane.b32.xlu0 %v584, 32
      %v2517 = vpop.permute.xlu0 %2516
      %2518 = vrot.lane.b32.xlu0 %v585, 32
      %v2519 = vpop.permute.xlu0 %2518
      %2520 = vrot.lane.b32.xlu0 %v586, 32
      %v2521 = vpop.permute.xlu0 %2520
      %2522 = vrot.lane.b32.xlu0 %v587, 32
      %v2523 = vpop.permute.xlu0 %2522
      %v2540 = vmul.f32 %v2189, %v2493
      %v2541 = vmul.f32 %v2191, %v2495
      %v2542 = vmul.f32 %v2193, %v2497
      %v2543 = vmul.f32 %v2195, %v2499
      %v2544 = vmul.f32 %v2197, %v2501
      %v2545 = vmul.f32 %v2199, %v2503
      %v2546 = vmul.f32 %v2201, %v2505
      %v2547 = vmul.f32 %v2203, %v2507
      %v2548 = vmul.f32 %v2205, %v2509
      %v2549 = vmul.f32 %v2207, %v2511
      %v2550 = vmul.f32 %v2209, %v2513
      %v2551 = vmul.f32 %v2211, %v2515
      %v2552 = vmul.f32 %v2213, %v2517
      %v2553 = vmul.f32 %v2215, %v2519
      %v2554 = vmul.f32 %v2217, %v2521
      %v2555 = vmul.f32 %v2219, %v2523
      %v2556 = vadd.f32 %v2476, %v2540
      %v2557 = vadd.f32 %v2477, %v2541
      %v2558 = vadd.f32 %v2478, %v2542
      %v2559 = vadd.f32 %v2479, %v2543
      %v2560 = vadd.f32 %v2480, %v2544
      %v2561 = vadd.f32 %v2481, %v2545
      %v2562 = vadd.f32 %v2482, %v2546
      %v2563 = vadd.f32 %v2483, %v2547
      %v2564 = vadd.f32 %v2484, %v2548
      %v2565 = vadd.f32 %v2485, %v2549
      %v2566 = vadd.f32 %v2486, %v2550
      %v2567 = vadd.f32 %v2487, %v2551
      %v2568 = vadd.f32 %v2488, %v2552
      %v2569 = vadd.f32 %v2489, %v2553
      %v2570 = vadd.f32 %v2490, %v2554
      %v2571 = vadd.f32 %v2491, %v2555
      %vm2572 = vcmask 523520
      %v2573 = vsel %vm2572, %v2556, -inf
      %2574 = vmax.xlane.f32.xlu0 %v2573
      %v2575 = vpop.xlane.xlu0 %2574
      %v2576 = vsel %vm2572, %v2557, -inf
      %2577 = vmax.xlane.f32.xlu0 %v2576
      %v2578 = vpop.xlane.xlu0 %2577
      %v2579 = vsel %vm2572, %v2558, -inf
      %2580 = vmax.xlane.f32.xlu0 %v2579
      %v2581 = vpop.xlane.xlu0 %2580
      %v2582 = vsel %vm2572, %v2559, -inf
      %2583 = vmax.xlane.f32.xlu0 %v2582
      %v2584 = vpop.xlane.xlu0 %2583
      %v2585 = vsel %vm2572, %v2560, -inf
      %2586 = vmax.xlane.f32.xlu0 %v2585
      %v2587 = vpop.xlane.xlu0 %2586
      %v2588 = vsel %vm2572, %v2561, -inf
      %2589 = vmax.xlane.f32.xlu0 %v2588
      %v2590 = vpop.xlane.xlu0 %2589
      %v2591 = vsel %vm2572, %v2562, -inf
      %2592 = vmax.xlane.f32.xlu0 %v2591
      %v2593 = vpop.xlane.xlu0 %2592
      %v2594 = vsel %vm2572, %v2563, -inf
      %2595 = vmax.xlane.f32.xlu0 %v2594
      %v2596 = vpop.xlane.xlu0 %2595
      %v2597 = vsel %vm2572, %v2564, -inf
      %2598 = vmax.xlane.f32.xlu0 %v2597
      %v2599 = vpop.xlane.xlu0 %2598
      %v2600 = vsel %vm2572, %v2565, -inf
      %2601 = vmax.xlane.f32.xlu0 %v2600
      %v2602 = vpop.xlane.xlu0 %2601
      %v2603 = vsel %vm2572, %v2566, -inf
      %2604 = vmax.xlane.f32.xlu0 %v2603
      %v2605 = vpop.xlane.xlu0 %2604
      %v2606 = vsel %vm2572, %v2567, -inf
      %2607 = vmax.xlane.f32.xlu0 %v2606
      %v2608 = vpop.xlane.xlu0 %2607
      %v2609 = vsel %vm2572, %v2568, -inf
      %2610 = vmax.xlane.f32.xlu0 %v2609
      %v2611 = vpop.xlane.xlu0 %2610
      %v2612 = vsel %vm2572, %v2569, -inf
      %2613 = vmax.xlane.f32.xlu0 %v2612
      %v2614 = vpop.xlane.xlu0 %2613
      %v2615 = vsel %vm2572, %v2570, -inf
      %2616 = vmax.xlane.f32.xlu0 %v2615
      %v2617 = vpop.xlane.xlu0 %2616
      %v2618 = vsel %vm2572, %v2571, -inf
      %2619 = vmax.xlane.f32.xlu0 %v2618
      %v2620 = vpop.xlane.xlu0 %2619
      %v2621 = vsub.f32 %v2556, %v2575
      %v2622 = vsub.f32 %v2557, %v2578
      %v2623 = vsub.f32 %v2558, %v2581
      %v2624 = vsub.f32 %v2559, %v2584
      %v2625 = vsub.f32 %v2560, %v2587
      %v2626 = vsub.f32 %v2561, %v2590
      %v2627 = vsub.f32 %v2562, %v2593
      %v2628 = vsub.f32 %v2563, %v2596
      %v2629 = vsub.f32 %v2564, %v2599
      %v2630 = vsub.f32 %v2565, %v2602
      %v2631 = vsub.f32 %v2566, %v2605
      %v2632 = vsub.f32 %v2567, %v2608
      %v2633 = vsub.f32 %v2568, %v2611
      %v2634 = vsub.f32 %v2569, %v2614
      %v2635 = vsub.f32 %v2570, %v2617
      %v2636 = vsub.f32 %v2571, %v2620
      %v2637 = vmul.f32 %v2621, 1.442695
      %v2638 = vpow.pop %v2637
      %v2639 = vmul.f32 %v2622, 1.442695
      %v2640 = vpow.pop %v2639
      %v2641 = vmul.f32 %v2623, 1.442695
      %v2642 = vpow.pop %v2641
      %v2643 = vmul.f32 %v2624, 1.442695
      %v2644 = vpow.pop %v2643
      %v2645 = vmul.f32 %v2625, 1.442695
      %v2646 = vpow.pop %v2645
      %v2647 = vmul.f32 %v2626, 1.442695
      %v2648 = vpow.pop %v2647
      %v2649 = vmul.f32 %v2627, 1.442695
      %v2650 = vpow.pop %v2649
      %v2651 = vmul.f32 %v2628, 1.442695
      %v2652 = vpow.pop %v2651
      %v2653 = vmul.f32 %v2629, 1.442695
      %v2654 = vpow.pop %v2653
      %v2655 = vmul.f32 %v2630, 1.442695
      %v2656 = vpow.pop %v2655
      %v2657 = vmul.f32 %v2631, 1.442695
      %v2658 = vpow.pop %v2657
      %v2659 = vmul.f32 %v2632, 1.442695
      %v2660 = vpow.pop %v2659
      %v2661 = vmul.f32 %v2633, 1.442695
      %v2662 = vpow.pop %v2661
      %v2663 = vmul.f32 %v2634, 1.442695
      %v2664 = vpow.pop %v2663
      %v2665 = vmul.f32 %v2635, 1.442695
      %v2666 = vpow.pop %v2665
      %v2667 = vmul.f32 %v2636, 1.442695
      %v2668 = vpow.pop %v2667
      %2685 = vrot.lane.b32.xlu0 %v2638, 96
      %v2686 = vpop.permute.xlu0 %2685
      %2687 = vrot.lane.b32.xlu0 %v2640, 96
      %v2688 = vpop.permute.xlu0 %2687
      %2689 = vrot.lane.b32.xlu0 %v2642, 96
      %v2690 = vpop.permute.xlu0 %2689
      %2691 = vrot.lane.b32.xlu0 %v2644, 96
      %v2692 = vpop.permute.xlu0 %2691
      %2693 = vrot.lane.b32.xlu0 %v2646, 96
      %v2694 = vpop.permute.xlu0 %2693
      %2695 = vrot.lane.b32.xlu0 %v2648, 96
      %v2696 = vpop.permute.xlu0 %2695
      %2697 = vrot.lane.b32.xlu0 %v2650, 96
      %v2698 = vpop.permute.xlu0 %2697
      %2699 = vrot.lane.b32.xlu0 %v2652, 96
      %v2700 = vpop.permute.xlu0 %2699
      %2701 = vrot.lane.b32.xlu0 %v2654, 96
      %v2702 = vpop.permute.xlu0 %2701
      %2703 = vrot.lane.b32.xlu0 %v2656, 96
      %v2704 = vpop.permute.xlu0 %2703
      %2705 = vrot.lane.b32.xlu0 %v2658, 96
      %v2706 = vpop.permute.xlu0 %2705
      %2707 = vrot.lane.b32.xlu0 %v2660, 96
      %v2708 = vpop.permute.xlu0 %2707
      %2709 = vrot.lane.b32.xlu0 %v2662, 96
      %v2710 = vpop.permute.xlu0 %2709
      %2711 = vrot.lane.b32.xlu0 %v2664, 96
      %v2712 = vpop.permute.xlu0 %2711
      %2713 = vrot.lane.b32.xlu0 %v2666, 96
      %v2714 = vpop.permute.xlu0 %2713
      %2715 = vrot.lane.b32.xlu0 %v2668, 96
      %v2716 = vpop.permute.xlu0 %2715
      %v2733 = vsel %vm1517, %v2686, 0.0
      %2734 = vadd.xlane.f32.xlu0 %v2733
      %v2735 = vpop.xlane.xlu0 %2734
      %v2736 = vsel %vm1517, %v2688, 0.0
      %2737 = vadd.xlane.f32.xlu0 %v2736
      %v2738 = vpop.xlane.xlu0 %2737
      %v2739 = vsel %vm1517, %v2690, 0.0
      %2740 = vadd.xlane.f32.xlu0 %v2739
      %v2741 = vpop.xlane.xlu0 %2740
      %v2742 = vsel %vm1517, %v2692, 0.0
      %2743 = vadd.xlane.f32.xlu0 %v2742
      %v2744 = vpop.xlane.xlu0 %2743
      %v2745 = vsel %vm1517, %v2694, 0.0
      %2746 = vadd.xlane.f32.xlu0 %v2745
      %v2747 = vpop.xlane.xlu0 %2746
      %v2748 = vsel %vm1517, %v2696, 0.0
      %2749 = vadd.xlane.f32.xlu0 %v2748
      %v2750 = vpop.xlane.xlu0 %2749
      %v2751 = vsel %vm1517, %v2698, 0.0
      %2752 = vadd.xlane.f32.xlu0 %v2751
      %v2753 = vpop.xlane.xlu0 %2752
      %v2754 = vsel %vm1517, %v2700, 0.0
      %2755 = vadd.xlane.f32.xlu0 %v2754
      %v2756 = vpop.xlane.xlu0 %2755
      %v2757 = vsel %vm1517, %v2702, 0.0
      %2758 = vadd.xlane.f32.xlu0 %v2757
      %v2759 = vpop.xlane.xlu0 %2758
      %v2760 = vsel %vm1517, %v2704, 0.0
      %2761 = vadd.xlane.f32.xlu0 %v2760
      %v2762 = vpop.xlane.xlu0 %2761
      %v2763 = vsel %vm1517, %v2706, 0.0
      %2764 = vadd.xlane.f32.xlu0 %v2763
      %v2765 = vpop.xlane.xlu0 %2764
      %v2766 = vsel %vm1517, %v2708, 0.0
      %2767 = vadd.xlane.f32.xlu0 %v2766
      %v2768 = vpop.xlane.xlu0 %2767
      %v2769 = vsel %vm1517, %v2710, 0.0
      %2770 = vadd.xlane.f32.xlu0 %v2769
      %v2771 = vpop.xlane.xlu0 %2770
      %v2772 = vsel %vm1517, %v2712, 0.0
      %2773 = vadd.xlane.f32.xlu0 %v2772
      %v2774 = vpop.xlane.xlu0 %2773
      %v2775 = vsel %vm1517, %v2714, 0.0
      %2776 = vadd.xlane.f32.xlu0 %v2775
      %v2777 = vpop.xlane.xlu0 %2776
      %v2778 = vsel %vm1517, %v2716, 0.0
      %2779 = vadd.xlane.f32.xlu0 %v2778
      %v2780 = vpop.xlane.xlu0 %2779
      %v2781 = vlog2.pop %v2735
      %v2782 = vmul.f32 %v2781, 0.6931472
      %v2783 = vlog2.pop %v2738
      %v2784 = vmul.f32 %v2783, 0.6931472
      %v2785 = vlog2.pop %v2741
      %v2786 = vmul.f32 %v2785, 0.6931472
      %v2787 = vlog2.pop %v2744
      %v2788 = vmul.f32 %v2787, 0.6931472
      %v2789 = vlog2.pop %v2747
      %v2790 = vmul.f32 %v2789, 0.6931472
      %v2791 = vlog2.pop %v2750
      %v2792 = vmul.f32 %v2791, 0.6931472
      %v2793 = vlog2.pop %v2753
      %v2794 = vmul.f32 %v2793, 0.6931472
      %v2795 = vlog2.pop %v2756
      %v2796 = vmul.f32 %v2795, 0.6931472
      %v2797 = vlog2.pop %v2759
      %v2798 = vmul.f32 %v2797, 0.6931472
      %v2799 = vlog2.pop %v2762
      %v2800 = vmul.f32 %v2799, 0.6931472
      %v2801 = vlog2.pop %v2765
      %v2802 = vmul.f32 %v2801, 0.6931472
      %v2803 = vlog2.pop %v2768
      %v2804 = vmul.f32 %v2803, 0.6931472
      %v2805 = vlog2.pop %v2771
      %v2806 = vmul.f32 %v2805, 0.6931472
      %v2807 = vlog2.pop %v2774
      %v2808 = vmul.f32 %v2807, 0.6931472
      %v2809 = vlog2.pop %v2777
      %v2810 = vmul.f32 %v2809, 0.6931472
      %v2811 = vlog2.pop %v2780
      %v2812 = vmul.f32 %v2811, 0.6931472
      %v2813 = vsub.f32 %v2621, %v2782
      %v2814 = vsub.f32 %v2622, %v2784
      %v2815 = vsub.f32 %v2623, %v2786
      %v2816 = vsub.f32 %v2624, %v2788
      %v2817 = vsub.f32 %v2625, %v2790
      %v2818 = vsub.f32 %v2626, %v2792
      %v2819 = vsub.f32 %v2627, %v2794
      %v2820 = vsub.f32 %v2628, %v2796
      %v2821 = vsub.f32 %v2629, %v2798
      %v2822 = vsub.f32 %v2630, %v2800
      %v2823 = vsub.f32 %v2631, %v2802
      %v2824 = vsub.f32 %v2632, %v2804
      %v2825 = vsub.f32 %v2633, %v2806
      %v2826 = vsub.f32 %v2634, %v2808
      %v2827 = vsub.f32 %v2635, %v2810
      %v2828 = vsub.f32 %v2636, %v2812
      %2845 = vrot.lane.b32.xlu0 %v2813, 96
      %v2846 = vpop.permute.xlu0 %2845
      %2847 = vrot.lane.b32.xlu0 %v2814, 96
      %v2848 = vpop.permute.xlu0 %2847
      %2849 = vrot.lane.b32.xlu0 %v2815, 96
      %v2850 = vpop.permute.xlu0 %2849
      %2851 = vrot.lane.b32.xlu0 %v2816, 96
      %v2852 = vpop.permute.xlu0 %2851
      %2853 = vrot.lane.b32.xlu0 %v2817, 96
      %v2854 = vpop.permute.xlu0 %2853
      %2855 = vrot.lane.b32.xlu0 %v2818, 96
      %v2856 = vpop.permute.xlu0 %2855
      %2857 = vrot.lane.b32.xlu0 %v2819, 96
      %v2858 = vpop.permute.xlu0 %2857
      %2859 = vrot.lane.b32.xlu0 %v2820, 96
      %v2860 = vpop.permute.xlu0 %2859
      %2861 = vrot.lane.b32.xlu0 %v2821, 96
      %v2862 = vpop.permute.xlu0 %2861
      %2863 = vrot.lane.b32.xlu0 %v2822, 96
      %v2864 = vpop.permute.xlu0 %2863
      %2865 = vrot.lane.b32.xlu0 %v2823, 96
      %v2866 = vpop.permute.xlu0 %2865
      %2867 = vrot.lane.b32.xlu0 %v2824, 96
      %v2868 = vpop.permute.xlu0 %2867
      %2869 = vrot.lane.b32.xlu0 %v2825, 96
      %v2870 = vpop.permute.xlu0 %2869
      %2871 = vrot.lane.b32.xlu0 %v2826, 96
      %v2872 = vpop.permute.xlu0 %2871
      %2873 = vrot.lane.b32.xlu0 %v2827, 96
      %v2874 = vpop.permute.xlu0 %2873
      %2875 = vrot.lane.b32.xlu0 %v2828, 96
      %v2876 = vpop.permute.xlu0 %2875
      %2893 = vst.msk [vmem:[%s349] sm:$0xff] %vm1517, %v2846
      %2894 = vst.msk [vmem:[%s349 + $0x8] sm:$0xff] %vm1517, %v2848
      %2895 = vst.msk [vmem:[%s349 + $0x10] sm:$0xff] %vm1517, %v2850
      %2896 = vst.msk [vmem:[%s349 + $0x18] sm:$0xff] %vm1517, %v2852
      %2897 = vst.msk [vmem:[%s349 + $0x20] sm:$0xff] %vm1517, %v2854
      %2898 = vst.msk [vmem:[%s349 + $0x28] sm:$0xff] %vm1517, %v2856
      %2899 = vst.msk [vmem:[%s349 + $0x30] sm:$0xff] %vm1517, %v2858
      %2900 = vst.msk [vmem:[%s349 + $0x38] sm:$0xff] %vm1517, %v2860
      %2901 = vst.msk [vmem:[%s349 + $0x40] sm:$0xff] %vm1517, %v2862
      %2902 = vst.msk [vmem:[%s349 + $0x48] sm:$0xff] %vm1517, %v2864
      %2903 = vst.msk [vmem:[%s349 + $0x50] sm:$0xff] %vm1517, %v2866
      %2904 = vst.msk [vmem:[%s349 + $0x58] sm:$0xff] %vm1517, %v2868
      %2905 = vst.msk [vmem:[%s349 + $0x60] sm:$0xff] %vm1517, %v2870
      %2906 = vst.msk [vmem:[%s349 + $0x68] sm:$0xff] %vm1517, %v2872
      %2907 = vst.msk [vmem:[%s349 + $0x70] sm:$0xff] %vm1517, %v2874
      %2908 = vst.msk [vmem:[%s349 + $0x78] sm:$0xff] %vm1517, %v2876
      %s2909 = smul.u32 16, %s19
      %p2910 = scmp.lt.s32.totalorder %s2909, 63
      %s2911 = scalar_select %p2910, %s2909, 63
      %s2912 = smul.addr %s2911, 8
      %s2913 = scalar_lea.vmem %s8, %s2912
      // Predicated region
      $region53: #{tpu_custom_call.1} parent=51 // pred_check
        %p2914 = pneg %p220
      $region54: #{tpu_custom_call.1} parent=51 // pred_check_branch
        %2916 = sbr.rel (%p2914) target = $region56
      $region55: #{tpu_custom_call.1} parent=51 // pred_region
        %s2917 = smul.u32 16, %s19
      $region56: #{tpu_custom_call.1} parent=51 // pred_fallthru
        _
    $region52: #{tpu_custom_call.1} parent=5 // pred_fallthru
      _
    %p2918 = scmp.le.s32.totalorder 2, %s14
    // Predicated region
    $region57: #{tpu_custom_call.1} parent=5 // pred_check
      %p2919 = pneg %p2918
    $region58: #{tpu_custom_call.1} parent=5 // pred_check_branch
      %2921 = sbr.rel (%p2919) target = $region60
    $region59: #{tpu_custom_call.1} parent=5 // pred_region
      %s2922 = ssub.s32 %s14, 2
      // Predicated region
      $region61: #{tpu_custom_call.1} parent=59 // pred_check
        %p2923 = pneg %p226
      $region62: #{tpu_custom_call.1} parent=59 // pred_check_branch
        %2925 = sbr.rel (%p2923) target = $region64
      $region63: #{tpu_custom_call.1} parent=59 // pred_region
        %s2926 = smul.u32 16, %s20
        %p2927 = scmp.lt.s32.totalorder %s2926, 63
        %s2928 = scalar_select %p2927, %s2926, 63
        %s2929 = smul.addr %s2928, 8
        %s2930 = scalar_lea.vmem %s8, %s2929
      $region64: #{tpu_custom_call.1} parent=59 // pred_fallthru
        _
    $region60: #{tpu_custom_call.1} parent=5 // pred_fallthru
      _
  $region6: #{tpu_custom_call.1} parent=0 // loop_footer
    %s18 = sadd.s32 1, %s14
  $region7: #{tpu_custom_call.1} parent=0 // loop_footer_branch
    %13 = sbr.rel target = $region3
  $region8: #{tpu_custom_call.1} parent=0 // loop_exit
    _

</llo_original>
